<compile_context>
chip_gen: v5e
topology: v5e:2x2
jax: 0.10.0
libtpu: 0.0.40
codegen_flags: <defaults>
</compile_context>

<pallas_src>
import math

import jax
import jax.numpy as jnp
import numpy as np
from jax.experimental import pallas as pl
from jax.experimental.pallas import tpu as pltpu


# ----------------------------------------------------------------------------
# Wrapper: builds the kernel (closure over static config) + pallas_call.
# ----------------------------------------------------------------------------
def yolo_layer_forward(x, img_size, anchors, num_classes=1, max_chunk=1024):
    """x: (B, nA*(num_classes+5) + E, H, W) float32, NCHW like PyTorch."""
    assert num_classes == 1, "JDE YOLOLayer uses num_classes == 1"
    B, C, H, W = x.shape
    nA = int(anchors.shape[0])
    ncls5 = num_classes + 5                   # 6
    box_ch = nA * ncls5                       # 24 for JDE
    E = C - box_ch
    N = H * W
    out_ch = ncls5 + E

    stride = img_size[0] / W
    assert stride == img_size[1] / H, "Inconsistent stride size"

    # Chunk along the flattened spatial axis (lanes). 1024 lanes keeps the
    # lane-padded output double-buffer well inside every generation's scoped
    # VMEM (v5e 16 MiB default, v7x 64 MiB physical) while staying at ~85% of
    # the HBM roofline per the measured tiling data.
    Nc = min(max_chunk, N)
    n_chunks = pl.cdiv(N, Nc)                 # partial last block is masked

    x_flat = x.reshape(B, C, N)               # contiguous: free reshape
    anchors_f = anchors.astype(jnp.float32)   # (nA, 2) original pixel anchors
    inv_w = 1.0 / W
    stride_f = float(stride)

    def kernel(anchor_ref, x_ref, out_ref):
        # anchor_ref : SMEM (nA, 2)       original anchor (w, h) in pixels
        # x_ref      : VMEM (C, Nc)       all channels, one batch, one chunk
        # out_ref    : VMEM (nA, Nc, 6+E) [bx, by, bw, bh, conf, cls, emb...]
        nc = x_ref.shape[1]

        # --- grid coordinates computed in-kernel (no DMA stream) -----------
        chunk_off = pl.program_id(0) * nc
        lane = jax.lax.broadcasted_iota(jnp.int32, (2, nc), 1) + chunk_off
        row2 = jax.lax.broadcasted_iota(jnp.int32, (2, nc), 0)  # 0->x/w, 1->y/h
        n_f = lane.astype(jnp.float32)
        # n = gy*W + gx ; +0.5 makes the float divide robust at exact multiples.
        gy = jnp.floor((n_f + 0.5) * inv_w)
        gx = n_f - gy * W
        # Pre-scaled by stride so only the ORIGINAL anchors are needed below:
        # (grid + (a/s)*dxy)*s == grid*s + a*dxy ; ((a/s)*exp(dwh))*s == a*exp(dwh)
        grid2 = jnp.where(row2 == 0, gx, gy) * stride_f          # (2, Nc)

        # --- embedding: L2-normalize over channels ONCE, reuse per anchor --
        emb = x_ref[box_ch:, :]                                  # (E, Nc)
        sumsq = jnp.sum(emb * emb, axis=0, keepdims=True)        # (1, Nc)
        inv_norm = jax.lax.rsqrt(jnp.maximum(sumsq, 1e-24))      # EUP
        emb_t = jnp.transpose(emb * inv_norm)                    # (Nc, E)

        zeros3 = jnp.zeros((3, nc), jnp.float32)                 # cls(=0) + pad

        for a in range(nA):                                      # nA tiny: unroll
            base = a * ncls5
            aw = anchor_ref[a, 0]
            ah = anchor_ref[a, 1]
            scale2 = jnp.where(row2 == 0, aw, ah)                # [aw ; ah]

            xy = x_ref[base:base + 2, :]                         # (2, Nc)
            wh = x_ref[base + 2:base + 4, :]                     # (2, Nc)
            bxy = grid2 + scale2 * xy
            bwh = scale2 * jnp.exp(wh)

            c0 = x_ref[base + 4:base + 5, :]
            c1 = x_ref[base + 5:base + 6, :]
            # softmax([c0, c1])[1] == sigmoid(c1 - c0) == 0.5*(tanh(.)+1):
            # EUP tanh, no divide, no exp overflow.
            conf = 0.5 * (jnp.tanh(0.5 * (c1 - c0)) + 1.0)

            # Pack [bx, by, bw, bh, conf, cls(0), pad, pad] -> (8, Nc),
            # transpose once (XLU), fuse with the shared embedding and emit
            # ONE store for the whole row of this anchor.
            head = jnp.concatenate([bxy, bwh, conf, zeros3], axis=0)  # (8, Nc)
            head_t = jnp.transpose(head)                              # (Nc, 8)
            full = jnp.concatenate([head_t[:, :6], emb_t], axis=1)    # (Nc, 6+E)
            out_ref[a] = full

    # Advisory cost so XLA overlaps the (HBM-bound, MXU-idle) call correctly.
    bytes_accessed = 4 * (B * C * N + nA * 2 + B * nA * N * out_ch)
    cost = pl.CostEstimate(
        flops=B * N * (3 * E + 12 * nA),
        transcendentals=B * N * (1 + 3 * nA),
        bytes_accessed=bytes_accessed,
    )

    out = pl.pallas_call(
        kernel,
        out_shape=jax.ShapeDtypeStruct((B, nA, N, out_ch), jnp.float32),
        grid=(n_chunks, B),                       # larger (chunk) axis first
        in_specs=[
            pl.BlockSpec(memory_space=pltpu.MemorySpace.SMEM),       # anchors
            pl.BlockSpec((None, C, Nc), lambda c, b: (b, 0, c)),     # x (all ch)
        ],
        out_specs=pl.BlockSpec((None, nA, Nc, out_ch),
                               lambda c, b: (b, 0, c, 0)),
        compiler_params=pltpu.CompilerParams(
            dimension_semantics=("parallel", "parallel")),
        cost_estimate=cost,
    )(anchors_f, x_flat)

    # (B, nA, N, 6+E) -> (B, nA*N, 6+E): contiguous merge, no data movement.
    return out.reshape(B, nA * N, out_ch)


# ----------------------------------------------------------------------------
# Pure-JAX reference (mirrors the PyTorch forward) for a correctness check.
# ----------------------------------------------------------------------------
def yolo_layer_ref(x, img_size, anchors, num_classes=1):
    B, C, H, W = x.shape
    nA = anchors.shape[0]
    box_ch = nA * (num_classes + 5)
    stride = img_size[0] / W
    anchor_vec = anchors / stride

    pa = x[:, :box_ch].reshape(B, nA, num_classes + 5, H, W)
    pa = jnp.transpose(pa, (0, 1, 3, 4, 2))                 # (B,nA,H,W,6)
    pe = jnp.transpose(x[:, box_ch:], (0, 2, 3, 1))         # (B,H,W,E)

    box = pa[..., :4]
    conf = jax.nn.softmax(pa[..., 4:6], axis=-1)[..., 1:2]
    emb = jnp.repeat(pe[:, None], nA, axis=1)
    emb = emb / jnp.maximum(
        jnp.linalg.norm(emb, axis=-1, keepdims=True), 1e-12)
    cls = jnp.zeros((B, nA, H, W, 1), jnp.float32)

    gy, gx = jnp.meshgrid(jnp.arange(H, dtype=jnp.float32),
                          jnp.arange(W, dtype=jnp.float32), indexing="ij")
    gx = gx[None, None]
    gy = gy[None, None]
    aw = anchor_vec[:, 0][None, :, None, None]
    ah = anchor_vec[:, 1][None, :, None, None]
    bx = (gx + aw * box[..., 0]) * stride
    by = (gy + ah * box[..., 1]) * stride
    bw = aw * jnp.exp(box[..., 2]) * stride
    bh = ah * jnp.exp(box[..., 3]) * stride
    box_d = jnp.stack([bx, by, bw, bh], axis=-1)

    out = jnp.concatenate([box_d, conf, cls, emb], axis=-1)
    return out.reshape(B, -1, out.shape[-1])


if __name__ == "__main__":
    # Module configuration (deterministic, in-script).
    anchors = jnp.array([[8.0, 24.0], [11.0, 34.0],
                         [16.0, 48.0], [23.0, 68.0]], dtype=jnp.float32)
    num_classes = 1
    emb_dim = 32
    num_identities = 14455
    # Training-only scaling (used in the loss head, not in forward):
    _emb_scale = math.sqrt(2) * math.log(num_identities - 1)

    B, H, W = 2, 16, 16
    nA = anchors.shape[0]
    C = nA * (num_classes + 5) + emb_dim                      # 24 + 32 = 56
    img_size = (64, 64)                                       # stride = 4

    key = jax.random.PRNGKey(0)
    x = jax.random.normal(key, (B, C, H, W), dtype=jnp.float32)

    out = yolo_layer_forward(x, img_size, anchors, num_classes)
    out = jax.block_until_ready(out)

    ref = yolo_layer_ref(x, img_size, anchors, num_classes)
    np.testing.assert_allclose(np.asarray(out), np.asarray(ref),
                               rtol=1e-4, atol=1e-4)
    assert out.shape == (B, nA * H * W, num_classes + 5 + emb_dim)
    print("KERNEL_OK")
</pallas_src>

<mosaic_0001>
module attributes {stable_mosaic.version = 11 : i64} {
  func.func @kernel(%arg0: i32, %arg1: i32, %arg2: memref<4x2xf32, #tpu.memory_space<smem>>, %arg3: memref<1x56x256xf32, #tpu.memory_space<vmem>>, %arg4: memref<1x4x256x38xf32, #tpu.memory_space<vmem>>) attributes {dimension_semantics = [#tpu.dimension_semantics<parallel>, #tpu.dimension_semantics<parallel>], iteration_bounds = array<i64: 1, 2>, scalar_prefetch = 0 : i64, scratch_operands = 0 : i64, tpu.core_type = #tpu.core_type<tc>, window_params = [{transform_indices = @transform_0, window_bounds = array<i64: 4, 2>}, {transform_indices = @transform_1, window_bounds = array<i64: 1, 56, 256>}, {transform_indices = @transform_2, window_bounds = array<i64: 1, 4, 256, 38>}]} {
    %c256_i32 = arith.constant 256 : i32
    %0 = arith.muli %arg0, %c256_i32 : i32
    %1 = tpu.iota {dimensions = array<i32: 1>} : vector<2x256xi32>
    %2 = vector.broadcast %0 : i32 to vector<2x256xi32>
    %3 = arith.addi %1, %2 : vector<2x256xi32>
    %4 = tpu.iota {dimensions = array<i32: 0>} : vector<2x256xi32>
    %5 = arith.sitofp %3 : vector<2x256xi32> to vector<2x256xf32>
    %cst = arith.constant 5.000000e-01 : f32
    %6 = vector.broadcast %cst : f32 to vector<2x256xf32>
    %7 = arith.addf %5, %6 : vector<2x256xf32>
    %cst_0 = arith.constant 6.250000e-02 : f32
    %8 = vector.broadcast %cst_0 : f32 to vector<2x256xf32>
    %9 = arith.mulf %7, %8 : vector<2x256xf32>
    %10 = math.floor %9 : vector<2x256xf32>
    %cst_1 = arith.constant 1.600000e+01 : f32
    %11 = vector.broadcast %cst_1 : f32 to vector<2x256xf32>
    %12 = arith.mulf %10, %11 : vector<2x256xf32>
    %13 = arith.subf %5, %12 : vector<2x256xf32>
    %c0_i32 = arith.constant 0 : i32
    %14 = vector.broadcast %c0_i32 : i32 to vector<2x256xi32>
    %15 = arith.cmpi eq, %4, %14 : vector<2x256xi32>
    %16 = arith.select %15, %13, %10 : vector<2x256xi1>, vector<2x256xf32>
    %cst_2 = arith.constant 4.000000e+00 : f32
    %17 = vector.broadcast %cst_2 : f32 to vector<2x256xf32>
    %18 = arith.mulf %16, %17 : vector<2x256xf32>
    %c0 = arith.constant 0 : index
    %c24 = arith.constant 24 : index
    %c0_3 = arith.constant 0 : index
    %19 = vector.load %arg3[%c0, %c24, %c0_3] : memref<1x56x256xf32, #tpu.memory_space<vmem>>, vector<1x32x256xf32>
    %20 = vector.shape_cast %19 : vector<1x32x256xf32> to vector<32x256xf32>
    %21 = arith.mulf %20, %20 : vector<32x256xf32>
    %cst_4 = arith.constant dense<0.000000e+00> : vector<256xf32>
    %22 = vector.multi_reduction <add>, %21, %cst_4 [0] : vector<32x256xf32> to vector<256xf32>
    %23 = vector.shape_cast %22 : vector<256xf32> to vector<1x256xf32>
    %cst_5 = arith.constant 1.000000e-24 : f32
    %24 = vector.broadcast %cst_5 : f32 to vector<1x256xf32>
    %25 = arith.maximumf %23, %24 : vector<1x256xf32>
    %26 = math.rsqrt %25 : vector<1x256xf32>
    %27 = vector.broadcast %26 : vector<1x256xf32> to vector<32x256xf32>
    %28 = arith.mulf %20, %27 : vector<32x256xf32>
    %29 = tpu.transpose %28, [1, 0] : vector<32x256xf32> -> vector<256x32xf32>
    %cst_6 = arith.constant 0.000000e+00 : f32
    %30 = vector.broadcast %cst_6 : f32 to vector<3x256xf32>
    %c0_7 = arith.constant 0 : index
    %c0_8 = arith.constant 0 : index
    %31 = memref.load %arg2[%c0_7, %c0_8] : memref<4x2xf32, #tpu.memory_space<smem>>
    %c0_9 = arith.constant 0 : index
    %c1 = arith.constant 1 : index
    %32 = memref.load %arg2[%c0_9, %c1] : memref<4x2xf32, #tpu.memory_space<smem>>
    %c0_i32_10 = arith.constant 0 : i32
    %33 = vector.broadcast %c0_i32_10 : i32 to vector<2x256xi32>
    %34 = arith.cmpi eq, %4, %33 : vector<2x256xi32>
    %35 = vector.broadcast %31 : f32 to vector<2x256xf32>
    %36 = vector.broadcast %32 : f32 to vector<2x256xf32>
    %37 = arith.select %34, %35, %36 : vector<2x256xi1>, vector<2x256xf32>
    %c0_11 = arith.constant 0 : index
    %c0_12 = arith.constant 0 : index
    %c0_13 = arith.constant 0 : index
    %38 = vector.load %arg3[%c0_11, %c0_12, %c0_13] : memref<1x56x256xf32, #tpu.memory_space<vmem>>, vector<1x2x256xf32>
    %39 = vector.shape_cast %38 : vector<1x2x256xf32> to vector<2x256xf32>
    %c0_14 = arith.constant 0 : index
    %c2 = arith.constant 2 : index
    %c0_15 = arith.constant 0 : index
    %40 = vector.load %arg3[%c0_14, %c2, %c0_15] : memref<1x56x256xf32, #tpu.memory_space<vmem>>, vector<1x2x256xf32>
    %41 = vector.shape_cast %40 : vector<1x2x256xf32> to vector<2x256xf32>
    %42 = arith.mulf %37, %39 : vector<2x256xf32>
    %43 = arith.addf %18, %42 : vector<2x256xf32>
    %44 = math.exp %41 : vector<2x256xf32>
    %45 = arith.mulf %37, %44 : vector<2x256xf32>
    %c0_16 = arith.constant 0 : index
    %c4 = arith.constant 4 : index
    %c0_17 = arith.constant 0 : index
    %46 = vector.load %arg3[%c0_16, %c4, %c0_17] : memref<1x56x256xf32, #tpu.memory_space<vmem>>, vector<1x1x256xf32>
    %47 = vector.shape_cast %46 : vector<1x1x256xf32> to vector<1x256xf32>
    %c0_18 = arith.constant 0 : index
    %c5 = arith.constant 5 : index
    %c0_19 = arith.constant 0 : index
    %48 = vector.load %arg3[%c0_18, %c5, %c0_19] : memref<1x56x256xf32, #tpu.memory_space<vmem>>, vector<1x1x256xf32>
    %49 = vector.shape_cast %48 : vector<1x1x256xf32> to vector<1x256xf32>
    %50 = arith.subf %49, %47 : vector<1x256xf32>
    %cst_20 = arith.constant 5.000000e-01 : f32
    %51 = vector.broadcast %cst_20 : f32 to vector<1x256xf32>
    %52 = arith.mulf %51, %50 : vector<1x256xf32>
    %53 = math.tanh %52 : vector<1x256xf32>
    %cst_21 = arith.constant 1.000000e+00 : f32
    %54 = vector.broadcast %cst_21 : f32 to vector<1x256xf32>
    %55 = arith.addf %53, %54 : vector<1x256xf32>
    %cst_22 = arith.constant 5.000000e-01 : f32
    %56 = vector.broadcast %cst_22 : f32 to vector<1x256xf32>
    %57 = arith.mulf %56, %55 : vector<1x256xf32>
    %58 = tpu.concatenate %43, %45, %57, %30 in 0 : vector<2x256xf32>, vector<2x256xf32>, vector<1x256xf32>, vector<3x256xf32> -> vector<8x256xf32>
    %59 = tpu.transpose %58, [1, 0] : vector<8x256xf32> -> vector<256x8xf32>
    %60 = vector.extract_strided_slice %59 {offsets = [0, 0], sizes = [256, 6], strides = [1, 1]} : vector<256x8xf32> to vector<256x6xf32>
    %61 = tpu.concatenate %60, %29 in 1 : vector<256x6xf32>, vector<256x32xf32> -> vector<256x38xf32>
    %c0_23 = arith.constant 0 : index
    %c0_24 = arith.constant 0 : index
    %c0_25 = arith.constant 0 : index
    %c0_26 = arith.constant 0 : index
    %62 = vector.load %arg4[%c0_23, %c0_24, %c0_25, %c0_26] : memref<1x4x256x38xf32, #tpu.memory_space<vmem>>, vector<1x1x256x38xf32>
    %63 = vector.shape_cast %62 : vector<1x1x256x38xf32> to vector<256x38xf32>
    %64 = vector.shape_cast %61 : vector<256x38xf32> to vector<1x1x256x38xf32>
    tpu.vector_store %arg4[%c0_23, %c0_24, %c0_25, %c0_26], %64 {strides = array<i32>} : memref<1x4x256x38xf32, #tpu.memory_space<vmem>>, vector<1x1x256x38xf32>,
    %c1_27 = arith.constant 1 : index
    %c0_28 = arith.constant 0 : index
    %65 = memref.load %arg2[%c1_27, %c0_28] : memref<4x2xf32, #tpu.memory_space<smem>>
    %c1_29 = arith.constant 1 : index
    %c1_30 = arith.constant 1 : index
    %66 = memref.load %arg2[%c1_29, %c1_30] : memref<4x2xf32, #tpu.memory_space<smem>>
    %c0_i32_31 = arith.constant 0 : i32
    %67 = vector.broadcast %c0_i32_31 : i32 to vector<2x256xi32>
    %68 = arith.cmpi eq, %4, %67 : vector<2x256xi32>
    %69 = vector.broadcast %65 : f32 to vector<2x256xf32>
    %70 = vector.broadcast %66 : f32 to vector<2x256xf32>
    %71 = arith.select %68, %69, %70 : vector<2x256xi1>, vector<2x256xf32>
    %c0_32 = arith.constant 0 : index
    %c6 = arith.constant 6 : index
    %c0_33 = arith.constant 0 : index
    %72 = vector.load %arg3[%c0_32, %c6, %c0_33] : memref<1x56x256xf32, #tpu.memory_space<vmem>>, vector<1x2x256xf32>
    %73 = vector.shape_cast %72 : vector<1x2x256xf32> to vector<2x256xf32>
    %c0_34 = arith.constant 0 : index
    %c8 = arith.constant 8 : index
    %c0_35 = arith.constant 0 : index
    %74 = vector.load %arg3[%c0_34, %c8, %c0_35] : memref<1x56x256xf32, #tpu.memory_space<vmem>>, vector<1x2x256xf32>
    %75 = vector.shape_cast %74 : vector<1x2x256xf32> to vector<2x256xf32>
    %76 = arith.mulf %71, %73 : vector<2x256xf32>
    %77 = arith.addf %18, %76 : vector<2x256xf32>
    %78 = math.exp %75 : vector<2x256xf32>
    %79 = arith.mulf %71, %78 : vector<2x256xf32>
    %c0_36 = arith.constant 0 : index
    %c10 = arith.constant 10 : index
    %c0_37 = arith.constant 0 : index
    %80 = vector.load %arg3[%c0_36, %c10, %c0_37] : memref<1x56x256xf32, #tpu.memory_space<vmem>>, vector<1x1x256xf32>
    %81 = vector.shape_cast %80 : vector<1x1x256xf32> to vector<1x256xf32>
    %c0_38 = arith.constant 0 : index
    %c11 = arith.constant 11 : index
    %c0_39 = arith.constant 0 : index
    %82 = vector.load %arg3[%c0_38, %c11, %c0_39] : memref<1x56x256xf32, #tpu.memory_space<vmem>>, vector<1x1x256xf32>
    %83 = vector.shape_cast %82 : vector<1x1x256xf32> to vector<1x256xf32>
    %84 = arith.subf %83, %81 : vector<1x256xf32>
    %cst_40 = arith.constant 5.000000e-01 : f32
    %85 = vector.broadcast %cst_40 : f32 to vector<1x256xf32>
    %86 = arith.mulf %85, %84 : vector<1x256xf32>
    %87 = math.tanh %86 : vector<1x256xf32>
    %cst_41 = arith.constant 1.000000e+00 : f32
    %88 = vector.broadcast %cst_41 : f32 to vector<1x256xf32>
    %89 = arith.addf %87, %88 : vector<1x256xf32>
    %cst_42 = arith.constant 5.000000e-01 : f32
    %90 = vector.broadcast %cst_42 : f32 to vector<1x256xf32>
    %91 = arith.mulf %90, %89 : vector<1x256xf32>
    %92 = tpu.concatenate %77, %79, %91, %30 in 0 : vector<2x256xf32>, vector<2x256xf32>, vector<1x256xf32>, vector<3x256xf32> -> vector<8x256xf32>
    %93 = tpu.transpose %92, [1, 0] : vector<8x256xf32> -> vector<256x8xf32>
    %94 = vector.extract_strided_slice %93 {offsets = [0, 0], sizes = [256, 6], strides = [1, 1]} : vector<256x8xf32> to vector<256x6xf32>
    %95 = tpu.concatenate %94, %29 in 1 : vector<256x6xf32>, vector<256x32xf32> -> vector<256x38xf32>
    %c0_43 = arith.constant 0 : index
    %c1_44 = arith.constant 1 : index
    %c0_45 = arith.constant 0 : index
    %c0_46 = arith.constant 0 : index
    %96 = vector.load %arg4[%c0_43, %c1_44, %c0_45, %c0_46] : memref<1x4x256x38xf32, #tpu.memory_space<vmem>>, vector<1x1x256x38xf32>
    %97 = vector.shape_cast %96 : vector<1x1x256x38xf32> to vector<256x38xf32>
    %98 = vector.shape_cast %95 : vector<256x38xf32> to vector<1x1x256x38xf32>
    tpu.vector_store %arg4[%c0_43, %c1_44, %c0_45, %c0_46], %98 {strides = array<i32>} : memref<1x4x256x38xf32, #tpu.memory_space<vmem>>, vector<1x1x256x38xf32>,
    %c2_47 = arith.constant 2 : index
    %c0_48 = arith.constant 0 : index
    %99 = memref.load %arg2[%c2_47, %c0_48] : memref<4x2xf32, #tpu.memory_space<smem>>
    %c2_49 = arith.constant 2 : index
    %c1_50 = arith.constant 1 : index
    %100 = memref.load %arg2[%c2_49, %c1_50] : memref<4x2xf32, #tpu.memory_space<smem>>
    %c0_i32_51 = arith.constant 0 : i32
    %101 = vector.broadcast %c0_i32_51 : i32 to vector<2x256xi32>
    %102 = arith.cmpi eq, %4, %101 : vector<2x256xi32>
    %103 = vector.broadcast %99 : f32 to vector<2x256xf32>
    %104 = vector.broadcast %100 : f32 to vector<2x256xf32>
    %105 = arith.select %102, %103, %104 : vector<2x256xi1>, vector<2x256xf32>
    %c0_52 = arith.constant 0 : index
    %c12 = arith.constant 12 : index
    %c0_53 = arith.constant 0 : index
    %106 = vector.load %arg3[%c0_52, %c12, %c0_53] : memref<1x56x256xf32, #tpu.memory_space<vmem>>, vector<1x2x256xf32>
    %107 = vector.shape_cast %106 : vector<1x2x256xf32> to vector<2x256xf32>
    %c0_54 = arith.constant 0 : index
    %c14 = arith.constant 14 : index
    %c0_55 = arith.constant 0 : index
    %108 = vector.load %arg3[%c0_54, %c14, %c0_55] : memref<1x56x256xf32, #tpu.memory_space<vmem>>, vector<1x2x256xf32>
    %109 = vector.shape_cast %108 : vector<1x2x256xf32> to vector<2x256xf32>
    %110 = arith.mulf %105, %107 : vector<2x256xf32>
    %111 = arith.addf %18, %110 : vector<2x256xf32>
    %112 = math.exp %109 : vector<2x256xf32>
    %113 = arith.mulf %105, %112 : vector<2x256xf32>
    %c0_56 = arith.constant 0 : index
    %c16 = arith.constant 16 : index
    %c0_57 = arith.constant 0 : index
    %114 = vector.load %arg3[%c0_56, %c16, %c0_57] : memref<1x56x256xf32, #tpu.memory_space<vmem>>, vector<1x1x256xf32>
    %115 = vector.shape_cast %114 : vector<1x1x256xf32> to vector<1x256xf32>
    %c0_58 = arith.constant 0 : index
    %c17 = arith.constant 17 : index
    %c0_59 = arith.constant 0 : index
    %116 = vector.load %arg3[%c0_58, %c17, %c0_59] : memref<1x56x256xf32, #tpu.memory_space<vmem>>, vector<1x1x256xf32>
    %117 = vector.shape_cast %116 : vector<1x1x256xf32> to vector<1x256xf32>
    %118 = arith.subf %117, %115 : vector<1x256xf32>
    %cst_60 = arith.constant 5.000000e-01 : f32
    %119 = vector.broadcast %cst_60 : f32 to vector<1x256xf32>
    %120 = arith.mulf %119, %118 : vector<1x256xf32>
    %121 = math.tanh %120 : vector<1x256xf32>
    %cst_61 = arith.constant 1.000000e+00 : f32
    %122 = vector.broadcast %cst_61 : f32 to vector<1x256xf32>
    %123 = arith.addf %121, %122 : vector<1x256xf32>
    %cst_62 = arith.constant 5.000000e-01 : f32
    %124 = vector.broadcast %cst_62 : f32 to vector<1x256xf32>
    %125 = arith.mulf %124, %123 : vector<1x256xf32>
    %126 = tpu.concatenate %111, %113, %125, %30 in 0 : vector<2x256xf32>, vector<2x256xf32>, vector<1x256xf32>, vector<3x256xf32> -> vector<8x256xf32>
    %127 = tpu.transpose %126, [1, 0] : vector<8x256xf32> -> vector<256x8xf32>
    %128 = vector.extract_strided_slice %127 {offsets = [0, 0], sizes = [256, 6], strides = [1, 1]} : vector<256x8xf32> to vector<256x6xf32>
    %129 = tpu.concatenate %128, %29 in 1 : vector<256x6xf32>, vector<256x32xf32> -> vector<256x38xf32>
    %c0_63 = arith.constant 0 : index
    %c2_64 = arith.constant 2 : index
    %c0_65 = arith.constant 0 : index
    %c0_66 = arith.constant 0 : index
    %130 = vector.load %arg4[%c0_63, %c2_64, %c0_65, %c0_66] : memref<1x4x256x38xf32, #tpu.memory_space<vmem>>, vector<1x1x256x38xf32>
    %131 = vector.shape_cast %130 : vector<1x1x256x38xf32> to vector<256x38xf32>
    %132 = vector.shape_cast %129 : vector<256x38xf32> to vector<1x1x256x38xf32>
    tpu.vector_store %arg4[%c0_63, %c2_64, %c0_65, %c0_66], %132 {strides = array<i32>} : memref<1x4x256x38xf32, #tpu.memory_space<vmem>>, vector<1x1x256x38xf32>,
    %c3 = arith.constant 3 : index
    %c0_67 = arith.constant 0 : index
    %133 = memref.load %arg2[%c3, %c0_67] : memref<4x2xf32, #tpu.memory_space<smem>>
    %c3_68 = arith.constant 3 : index
    %c1_69 = arith.constant 1 : index
    %134 = memref.load %arg2[%c3_68, %c1_69] : memref<4x2xf32, #tpu.memory_space<smem>>
    %c0_i32_70 = arith.constant 0 : i32
    %135 = vector.broadcast %c0_i32_70 : i32 to vector<2x256xi32>
    %136 = arith.cmpi eq, %4, %135 : vector<2x256xi32>
    %137 = vector.broadcast %133 : f32 to vector<2x256xf32>
    %138 = vector.broadcast %134 : f32 to vector<2x256xf32>
    %139 = arith.select %136, %137, %138 : vector<2x256xi1>, vector<2x256xf32>
    %c0_71 = arith.constant 0 : index
    %c18 = arith.constant 18 : index
    %c0_72 = arith.constant 0 : index
    %140 = vector.load %arg3[%c0_71, %c18, %c0_72] : memref<1x56x256xf32, #tpu.memory_space<vmem>>, vector<1x2x256xf32>
    %141 = vector.shape_cast %140 : vector<1x2x256xf32> to vector<2x256xf32>
    %c0_73 = arith.constant 0 : index
    %c20 = arith.constant 20 : index
    %c0_74 = arith.constant 0 : index
    %142 = vector.load %arg3[%c0_73, %c20, %c0_74] : memref<1x56x256xf32, #tpu.memory_space<vmem>>, vector<1x2x256xf32>
    %143 = vector.shape_cast %142 : vector<1x2x256xf32> to vector<2x256xf32>
    %144 = arith.mulf %139, %141 : vector<2x256xf32>
    %145 = arith.addf %18, %144 : vector<2x256xf32>
    %146 = math.exp %143 : vector<2x256xf32>
    %147 = arith.mulf %139, %146 : vector<2x256xf32>
    %c0_75 = arith.constant 0 : index
    %c22 = arith.constant 22 : index
    %c0_76 = arith.constant 0 : index
    %148 = vector.load %arg3[%c0_75, %c22, %c0_76] : memref<1x56x256xf32, #tpu.memory_space<vmem>>, vector<1x1x256xf32>
    %149 = vector.shape_cast %148 : vector<1x1x256xf32> to vector<1x256xf32>
    %c0_77 = arith.constant 0 : index
    %c23 = arith.constant 23 : index
    %c0_78 = arith.constant 0 : index
    %150 = vector.load %arg3[%c0_77, %c23, %c0_78] : memref<1x56x256xf32, #tpu.memory_space<vmem>>, vector<1x1x256xf32>
    %151 = vector.shape_cast %150 : vector<1x1x256xf32> to vector<1x256xf32>
    %152 = arith.subf %151, %149 : vector<1x256xf32>
    %cst_79 = arith.constant 5.000000e-01 : f32
    %153 = vector.broadcast %cst_79 : f32 to vector<1x256xf32>
    %154 = arith.mulf %153, %152 : vector<1x256xf32>
    %155 = math.tanh %154 : vector<1x256xf32>
    %cst_80 = arith.constant 1.000000e+00 : f32
    %156 = vector.broadcast %cst_80 : f32 to vector<1x256xf32>
    %157 = arith.addf %155, %156 : vector<1x256xf32>
    %cst_81 = arith.constant 5.000000e-01 : f32
    %158 = vector.broadcast %cst_81 : f32 to vector<1x256xf32>
    %159 = arith.mulf %158, %157 : vector<1x256xf32>
    %160 = tpu.concatenate %145, %147, %159, %30 in 0 : vector<2x256xf32>, vector<2x256xf32>, vector<1x256xf32>, vector<3x256xf32> -> vector<8x256xf32>
    %161 = tpu.transpose %160, [1, 0] : vector<8x256xf32> -> vector<256x8xf32>
    %162 = vector.extract_strided_slice %161 {offsets = [0, 0], sizes = [256, 6], strides = [1, 1]} : vector<256x8xf32> to vector<256x6xf32>
    %163 = tpu.concatenate %162, %29 in 1 : vector<256x6xf32>, vector<256x32xf32> -> vector<256x38xf32>
    %c0_82 = arith.constant 0 : index
    %c3_83 = arith.constant 3 : index
    %c0_84 = arith.constant 0 : index
    %c0_85 = arith.constant 0 : index
    %164 = vector.load %arg4[%c0_82, %c3_83, %c0_84, %c0_85] : memref<1x4x256x38xf32, #tpu.memory_space<vmem>>, vector<1x1x256x38xf32>
    %165 = vector.shape_cast %164 : vector<1x1x256x38xf32> to vector<256x38xf32>
    %166 = vector.shape_cast %163 : vector<256x38xf32> to vector<1x1x256x38xf32>
    tpu.vector_store %arg4[%c0_82, %c3_83, %c0_84, %c0_85], %166 {strides = array<i32>} : memref<1x4x256x38xf32, #tpu.memory_space<vmem>>, vector<1x1x256x38xf32>,
    return
  }
  func.func @transform_0(%arg0: i32, %arg1: i32) -> (i32, i32) {
    %c0_i32 = arith.constant 0 : i32
    %c0_i32_0 = arith.constant 0 : i32
    %c0_i32_1 = arith.constant 0 : i32
    return %c0_i32, %c0_i32_0 : i32, i32
  }
  func.func @transform_1(%arg0: i32, %arg1: i32) -> (i32, i32, i32) {
    %c0_i32 = arith.constant 0 : i32
    %c0_i32_0 = arith.constant 0 : i32
    return %arg1, %c0_i32, %arg0 : i32, i32, i32
  }
  func.func @transform_2(%arg0: i32, %arg1: i32) -> (i32, i32, i32, i32) {
    %c0_i32 = arith.constant 0 : i32
    %c0_i32_0 = arith.constant 0 : i32
    %c0_i32_1 = arith.constant 0 : i32
    return %arg1, %c0_i32, %arg0, %c0_i32_0 : i32, i32, i32, i32
  }
}

</mosaic_0001>

<llo_original>
// kernel: tpu_custom_call.1
$region0: #{tpu_custom_call.1}
  #allocation0 [shape = 'u32[]', space=smem, size = 0x4, offset = 0x4, fixed_abs, tag = 'smem constant byte address 0x4 - core index']
  #allocation1 [shape = 'u32[72,128]{1,0:T(1,128)}', space=vmem, size = 0x9000, scoped, tag = 'internal scratch']
  %s0 = inlined_call_operand.vmem [shape: f32[4,2], index: 0, kind: input, shape index: {}]
  %s1 = inlined_call_operand.hbm [shape: f32[2,56,256], index: 1, kind: input, shape index: {}]
  %s2 = inlined_call_operand.vmem [shape: f32[2,4,256,38], index: 2, kind: output, shape index: {}]
  %s3 = sld [smem:[#allocation0]]
  $region49: #{tpu_custom_call.1} parent=0
    _
  %s5 = ssub.s32 1, %s3
  %s6 = scalar_select 0, %s5, %s3
  $region1: #{tpu_custom_call.1} parent=0
    #allocation2 [shape = 'u8[2048]{0}', space=smem, size = 0x800, scoped, tag = 'input window, operand 0, single buffered']
    #allocation3 [shape = 's32[2]{0}', space=sflag, size = 0x8, scoped, tag = 'scoped memory for tpu_custom_call.1']
    #allocation4 [shape = 's32[2]{0}', space=sflag, size = 0x8, scoped, tag = 'scoped memory for tpu_custom_call.1']
    #allocation5 [shape = 'u8[114688]{0}', space=vmem, size = 0x1c000, scoped, tag = 'input window, operand 1']
    %7 = vsyncpa [#allocation4], 0
    %8 = vsyncpa [#allocation3], 0
    %s9 = scalar_lea.sflag [#allocation3], 1
    %10 = vsyncpa %s9, 0
    loop: start=0, step=1, limit=4
    $region2: #{tpu_custom_call.1} parent=1 // loop_pre_header
      _
    $region3: #{tpu_custom_call.1} parent=1 // loop_header
      %s12 = sphi 0, %s16
      %p13 = scmp.ge.s32.totalorder %s12, 4
      %s19 = sphi 0, %s31
      %s20 = sphi 0, %s27
      %s21 = sphi 0, %s19
      %s22 = sphi 0, %s20
      %s23 = sphi 0, %s21
      %s24 = sphi 0, %s22
      %s32 = sphi 0, %s32
      %s34 = sphi 0, %s32
      %s35 = sphi 0, %s34
      %s49 = sphi 0, %s35
      %s57 = sphi 0, %s59
      %s60 = sphi 0, %s57
      %s61 = sphi 0, %s60
      %s77 = sphi 0, %s61
      %s85 = sphi 0, %s87
      %s88 = sphi 0, %s85
      %s89 = sphi 0, %s88
      %s105 = sphi 0, %s89
    $region4: #{tpu_custom_call.1} parent=1 // loop_header_branch
      %15 = sbr.rel (%p13) target = $region8
    $region5: #{tpu_custom_call.1} parent=1 // loop_body
      %s17 = ssub.s32 %s12, 1
      %s18 = ssub.s32 %s12, 2
      %s25 = sadd.s32 1, %s20
      %p26 = scmp.ge.s32.totalorder %s25, 2
      %s27 = scalar_select %p26, 0, %s25
      %s28 = sadd.s32 1, %s19
      %s29 = scalar_select %p26, %s28, %s19
      %p30 = scmp.ge.s32.totalorder %s29, 1
      %s31 = scalar_select %p30, 0, %s29
      %s33 = sadd.s32 %s32, 1
      %p36 = scmp.eq.s32.totalorder %s12, 1
      %p37 = scmp.ne.s32.totalorder %s32, %s34
      %p38 = scmp.eq.s32.totalorder %s12, 0
      %p39 = por %p37, %p38
      %p40 = scmp.ne.s32.totalorder %s32, %s34
      %p41 = scmp.eq.s32.totalorder %s17, 1
      %p42 = por %p40, %p41
      %p43 = scmp.ne.s32.totalorder %s34, %s35
      %p44 = scmp.eq.s32.totalorder %s17, 0
      %p45 = por %p43, %p44
      %p46 = scmp.ne.s32.totalorder %s34, %s35
      %p47 = scmp.eq.s32.totalorder %s18, 1
      %p48 = por %p46, %p47
      %p50 = scmp.ne.s32.totalorder %s35, %s49
      %p51 = scmp.eq.s32.totalorder %s18, 0
      %p52 = por %p50, %p51
      %s53 = ssub.s32 %s20, %s27
      %s54 = ssub.s32 %s19, %s31
      %s55 = sor.u32 %s53, %s54
      %p56 = scmp.eq.s32.totalorder %s55, 0
      %s58 = sadd.s32 %s57, 1
      %s59 = scalar_select %p56, %s57, %s58
      %p62 = pneg %p56
      %p63 = scmp.eq.s32.totalorder %s12, 1
      %p64 = por %p62, %p63
      %p65 = scmp.ne.s32.totalorder %s57, %s60
      %p66 = scmp.eq.s32.totalorder %s12, 0
      %p67 = por %p65, %p66
      %p68 = scmp.ne.s32.totalorder %s57, %s60
      %p69 = scmp.eq.s32.totalorder %s17, 1
      %p70 = por %p68, %p69
      %p71 = scmp.ne.s32.totalorder %s60, %s61
      %p72 = scmp.eq.s32.totalorder %s17, 0
      %p73 = por %p71, %p72
      %p74 = scmp.ne.s32.totalorder %s60, %s61
      %p75 = scmp.eq.s32.totalorder %s18, 1
      %p76 = por %p74, %p75
      %p78 = scmp.ne.s32.totalorder %s61, %s77
      %p79 = scmp.eq.s32.totalorder %s18, 0
      %p80 = por %p78, %p79
      %s81 = ssub.s32 %s20, %s27
      %s82 = ssub.s32 %s19, %s31
      %s83 = sor.u32 %s81, %s82
      %p84 = scmp.eq.s32.totalorder %s83, 0
      %s86 = sadd.s32 %s85, 1
      %s87 = scalar_select %p84, %s85, %s86
      %p90 = pneg %p84
      %p91 = scmp.eq.s32.totalorder %s12, 1
      %p92 = por %p90, %p91
      %p93 = scmp.ne.s32.totalorder %s85, %s88
      %p94 = scmp.eq.s32.totalorder %s12, 0
      %p95 = por %p93, %p94
      %p96 = scmp.ne.s32.totalorder %s85, %s88
      %p97 = scmp.eq.s32.totalorder %s17, 1
      %p98 = por %p96, %p97
      %p99 = scmp.ne.s32.totalorder %s88, %s89
      %p100 = scmp.eq.s32.totalorder %s17, 0
      %p101 = por %p99, %p100
      %p102 = scmp.ne.s32.totalorder %s88, %s89
      %p103 = scmp.eq.s32.totalorder %s18, 1
      %p104 = por %p102, %p103
      %p106 = scmp.ne.s32.totalorder %s89, %s105
      %p107 = scmp.eq.s32.totalorder %s18, 0
      %p108 = por %p106, %p107
      %p109 = scmp.le.s32.totalorder 1, %s12
      %p110 = scmp.lt.s32.totalorder %s12, 3
      %p111 = pnand %p109, %p110
      %p112 = pneg %p111
      // Predicated region
      $region9: #{tpu_custom_call.1} parent=5 // pred_check
        _
      $region10: #{tpu_custom_call.1} parent=5 // pred_check_branch
        %114 = sbr.rel (%p111) target = $region12
      $region11: #{tpu_custom_call.1} parent=5 // pred_region
        %s115 = ssub.s32 %s12, 1
        // Predicated region
        $region13: #{tpu_custom_call.1} parent=11 // pred_check
          %p116 = pneg %p45
        $region14: #{tpu_custom_call.1} parent=11 // pred_check_branch
          %118 = sbr.rel (%p116) target = $region16
        $region15: #{tpu_custom_call.1} parent=11 // pred_region
          %120 = vsyncadd [#allocation4], 0
          %s122 = sshll.u32 %s0, 4
          %s123 = int_to_ptr.vmem [resolvable:$true] %s122
          %125 = dma.vmem_to_smem %s123, 64, [#allocation2], [#allocation4]
        $region16: #{tpu_custom_call.1} parent=11 // pred_fallthru
          _
      $region12: #{tpu_custom_call.1} parent=5 // pred_fallthru
        _
      %p126 = scmp.lt.s32.totalorder %s12, 2
      // Predicated region
      $region17: #{tpu_custom_call.1} parent=5 // pred_check
        %p127 = pneg %p126
      $region18: #{tpu_custom_call.1} parent=5 // pred_check_branch
        %129 = sbr.rel (%p127) target = $region20
      $region19: #{tpu_custom_call.1} parent=5 // pred_region
        // Predicated region
        $region21: #{tpu_custom_call.1} parent=19 // pred_check
          %p130 = pneg %p67
        $region22: #{tpu_custom_call.1} parent=19 // pred_check_branch
          %132 = sbr.rel (%p130) target = $region24
        $region23: #{tpu_custom_call.1} parent=19 // pred_region
          %s133 = sand.u32 %s57, 1
          %s134 = scalar_lea.sflag [#allocation3], %s133
          %s135 = sand.u32 %s57, 1
          %s136 = smul.addr %s135, 112
          %s137 = scalar_lea.vmem [#allocation5], %s136
          %s138 = smul.u32 2, %s19
          %140 = vsyncadd %s134, 0
          %s141 = smul.addr %s20, 14
          %s142 = sadd.s32 %s138, %s141
          %s143 = smul.addr %s142, 8
          %s144 = scalar_lea.hbm %s1, %s143
          %s145 = sshll.u32 %s144, 4
          %s146 = int_to_ptr.hbm [resolvable:$true] %s145
          %s147 = sshll.u32 %s137, 4
          %s148 = int_to_ptr.vmem [resolvable:$true] %s147
          %153 = dma.hbm_to_vmem [thread:$0]  %s146, 1792, %s148, %s134, 256, 256, 16
        $region24: #{tpu_custom_call.1} parent=19 // pred_fallthru
          _
      $region20: #{tpu_custom_call.1} parent=5 // pred_fallthru
        _
      %p154 = scmp.le.s32.totalorder 1, %s12
      %p155 = scmp.lt.s32.totalorder %s12, 3
      %p156 = pnand %p154, %p155
      %p157 = pneg %p156
      // Predicated region
      $region25: #{tpu_custom_call.1} parent=5 // pred_check
        _
      $region26: #{tpu_custom_call.1} parent=5 // pred_check_branch
        %159 = sbr.rel (%p156) target = $region28
      $region27: #{tpu_custom_call.1} parent=5 // pred_region
        %s160 = ssub.s32 %s12, 1
        // Predicated region
        $region29: #{tpu_custom_call.1} parent=27 // pred_check
          %p161 = pneg %p45
        $region30: #{tpu_custom_call.1} parent=27 // pred_check_branch
          %163 = sbr.rel (%p161) target = $region32
        $region31: #{tpu_custom_call.1} parent=27 // pred_region
          %165 = dma.done [#allocation4], 64
        $region32: #{tpu_custom_call.1} parent=27 // pred_fallthru
          _
        %s166 = sand.u32 %s60, 1
        %s167 = scalar_lea.sflag [#allocation3], %s166
        %s168 = sand.u32 %s60, 1
        %s169 = smul.addr %s168, 112
        %s170 = scalar_lea.vmem [#allocation5], %s169
        // Predicated region
        $region33: #{tpu_custom_call.1} parent=27 // pred_check
          %p171 = pneg %p73
        $region34: #{tpu_custom_call.1} parent=27 // pred_check_branch
          %173 = sbr.rel (%p171) target = $region36
        $region35: #{tpu_custom_call.1} parent=27 // pred_region
          %175 = dma.done %s167, 1792
        $region36: #{tpu_custom_call.1} parent=27 // pred_fallthru
          _
        %176 = sfence
        %p177 = pneg %p45
        %p178 = pneg %p42
        %s179 = sand.u32 %s60, 1
        %s180 = scalar_lea.sflag [#allocation3], %s179
        %s181 = sand.u32 %s60, 1
        %s182 = smul.addr %s181, 112
        %s183 = scalar_lea.vmem [#allocation5], %s182
        %p184 = pneg %p73
        %p185 = pneg %p70
        %p186 = pneg %p101
        %p187 = pneg %p98
        %s188 = smul.u32 32, %s21
        %p189 = scmp.lt.s32.totalorder %s22, 1
        %s190 = scalar_select %p189, %s22, 1
        %p191 = scmp.lt.s32.totalorder %s188, 31
        %s192 = scalar_select %p191, %s188, 31
        %s193 = smul.addr %s190, 128
        %s194 = sadd.s32 %s192, %s193
        %s195 = smul.addr %s194, 8
        %s196 = scalar_lea.vmem %s2, %s195
        %s197 = smul.u32 2, %s21
        %s198 = smul.u32 32, %s21
        %p199 = scmp.lt.s32.totalorder %s22, 1
        %s200 = scalar_select %p199, %s22, 1
        %p201 = scmp.lt.s32.totalorder %s198, 31
        %s202 = scalar_select %p201, %s198, 31
        %s203 = smul.addr %s200, 128
        %s204 = sadd.s32 %s202, %s203
        %s205 = smul.addr %s204, 8
        %s206 = scalar_lea.vmem %s2, %s205
        %s207 = smul.u32 32, %s21
        %s208 = smul.u32 %s21, 256
        %v209 = vlaneseq
        %v210 = vand.u32 %v209, 127
        %v211 = vadd.s32 %v210, 128
        %v212 = vstv %s208
        %v213 = vadd.s32 %v210, %v212
        %v214 = vadd.s32 %v211, %v212
        %v215 = vlaneseq
        %v216 = vshrl.u32 %v215, 7
        %v217 = vcvt.s32.f32 %v213
        %v218 = vcvt.s32.f32 %v214
        %v219 = vadd.f32 %v217, 0.5
        %v220 = vadd.f32 %v218, 0.5
        %v221 = vmul.f32 %v219, 0.0625
        %v222 = vmul.f32 %v220, 0.0625
        %v223 = vfloor.f32 %v221
        %v224 = vfloor.f32 %v222
        %v225 = vmul.f32 %v223, 16.0
        %v226 = vmul.f32 %v224, 16.0
        %v227 = vsub.f32 %v217, %v225
        %v228 = vsub.f32 %v218, %v226
        %vm229 = vcmp.eq.s32.totalorder %v216, 0
        %v230 = vsel %vm229, %v227, %v223
        %v231 = vsel %vm229, %v228, %v224
        %v232 = vmul.f32 %v230, 4.0
        %v233 = vmul.f32 %v231, 4.0
        %v234 = vld [vmem:[%s170 + $0x30] sm:$0xff]
        %v235 = vld [vmem:[%s170 + $0x38] sm:$0xff]
        %v236 = vld [vmem:[%s170 + $0x40] sm:$0xff]
        %v237 = vld [vmem:[%s170 + $0x48] sm:$0xff]
        %v238 = vld [vmem:[%s170 + $0x50] sm:$0xff]
        %v239 = vld [vmem:[%s170 + $0x58] sm:$0xff]
        %v240 = vld [vmem:[%s170 + $0x60] sm:$0xff]
        %v241 = vld [vmem:[%s170 + $0x68] sm:$0xff]
        %v242 = vmul.f32 %v234, %v234
        %v243 = vmul.f32 %v235, %v235
        %v244 = vmul.f32 %v236, %v236
        %v245 = vmul.f32 %v237, %v237
        %v246 = vmul.f32 %v238, %v238
        %v247 = vmul.f32 %v239, %v239
        %v248 = vmul.f32 %v240, %v240
        %v249 = vmul.f32 %v241, %v241
        %v250 = vadd.f32 %v242, %v244
        %v251 = vadd.f32 %v250, %v246
        %v252 = vadd.f32 %v251, %v248
        %v253 = vrot.slane %v252, 4
        %v254 = vadd.f32 %v252, %v253
        %v255 = vrot.slane %v254, 2
        %v256 = vadd.f32 %v254, %v255
        %v257 = vrot.slane %v256, 1
        %v258 = vadd.f32 %v256, %v257
        %v259 = vadd.f32 %v243, %v245
        %v260 = vadd.f32 %v259, %v247
        %v261 = vadd.f32 %v260, %v249
        %v262 = vrot.slane %v261, 4
        %v263 = vadd.f32 %v261, %v262
        %v264 = vrot.slane %v263, 2
        %v265 = vadd.f32 %v263, %v264
        %v266 = vrot.slane %v265, 1
        %v267 = vadd.f32 %v265, %v266
        %v268 = vmax.f32 %v258, 1e-24
        %v269 = vmax.f32 %v267, 1e-24
        %v270 = vrsqrt.pop %v268
        %v271 = vmul.f32 %v270, %v268
        %v272 = vmul.f32 %v271, %v270
        %v273 = vmul.f32 0.5, %v272
        %v274 = vsub.f32 1.5, %v273
        %v275 = vmul.f32 %v270, %v274
        %vm276 = vweird.f32 %v268
        %vm277 = vweird.f32 %v270
        %vm278 = vmor %vm276, %vm277
        %v279 = vsel %vm278, %v270, %v275
        %v280 = vrsqrt.pop %v269
        %v281 = vmul.f32 %v280, %v269
        %v282 = vmul.f32 %v281, %v280
        %v283 = vmul.f32 0.5, %v282
        %v284 = vsub.f32 1.5, %v283
        %v285 = vmul.f32 %v280, %v284
        %vm286 = vweird.f32 %v269
        %vm287 = vweird.f32 %v280
        %vm288 = vmor %vm286, %vm287
        %v289 = vsel %vm288, %v280, %v285
        %v290 = vmul.f32 %v234, %v279
        %v291 = vmul.f32 %v235, %v289
        %v292 = vmul.f32 %v236, %v279
        %v293 = vmul.f32 %v237, %v289
        %v294 = vmul.f32 %v238, %v279
        %v295 = vmul.f32 %v239, %v289
        %v296 = vmul.f32 %v240, %v279
        %v297 = vmul.f32 %v241, %v289
        %298 = vxpose.xlu0.b32.start [1/16] %v290, 128
        %299 = vxpose.xlu0.b32.cont [2/16] %v292, 128
        %300 = vxpose.xlu0.b32.cont [3/16] %v294, 128
        %301 = vxpose.xlu0.b32.cont [4/16] %v296, 128
        %302 = vxpose.xlu0.b32.cont [5/16] 0.0, 128
        %303 = vxpose.xlu0.b32.cont [6/16] 0.0, 128
        %304 = vxpose.xlu0.b32.cont [7/16] 0.0, 128
        %305 = vxpose.xlu0.b32.cont [8/16] 0.0, 128
        %306 = vxpose.xlu0.b32.cont [9/16] 0.0, 128
        %307 = vxpose.xlu0.b32.cont [10/16] 0.0, 128
        %308 = vxpose.xlu0.b32.cont [11/16] 0.0, 128
        %309 = vxpose.xlu0.b32.cont [12/16] 0.0, 128
        %310 = vxpose.xlu0.b32.cont [13/16] 0.0, 128
        %311 = vxpose.xlu0.b32.cont [14/16] 0.0, 128
        %312 = vxpose.xlu0.b32.cont [15/16] 0.0, 128
        %313 = vxpose.xlu0.b32.end [16/16] 0.0, 128
        %v314 = vpop.trf.xlu0
        %v315 = vpop.trf.xlu0
        %v316 = vpop.trf.xlu0
        %v317 = vpop.trf.xlu0
        %v318 = vpop.trf.xlu0
        %v319 = vpop.trf.xlu0
        %v320 = vpop.trf.xlu0
        %v321 = vpop.trf.xlu0
        %v322 = vpop.trf.xlu0
        %v323 = vpop.trf.xlu0
        %v324 = vpop.trf.xlu0
        %v325 = vpop.trf.xlu0
        %v326 = vpop.trf.xlu0
        %v327 = vpop.trf.xlu0
        %v328 = vpop.trf.xlu0
        %v329 = vpop.trf.xlu0
        %330 = vxpose.xlu0.b32.start [1/16] %v291, 128
        %331 = vxpose.xlu0.b32.cont [2/16] %v293, 128
        %332 = vxpose.xlu0.b32.cont [3/16] %v295, 128
        %333 = vxpose.xlu0.b32.cont [4/16] %v297, 128
        %334 = vxpose.xlu0.b32.cont [5/16] 0.0, 128
        %335 = vxpose.xlu0.b32.cont [6/16] 0.0, 128
        %336 = vxpose.xlu0.b32.cont [7/16] 0.0, 128
        %337 = vxpose.xlu0.b32.cont [8/16] 0.0, 128
        %338 = vxpose.xlu0.b32.cont [9/16] 0.0, 128
        %339 = vxpose.xlu0.b32.cont [10/16] 0.0, 128
        %340 = vxpose.xlu0.b32.cont [11/16] 0.0, 128
        %341 = vxpose.xlu0.b32.cont [12/16] 0.0, 128
        %342 = vxpose.xlu0.b32.cont [13/16] 0.0, 128
        %343 = vxpose.xlu0.b32.cont [14/16] 0.0, 128
        %344 = vxpose.xlu0.b32.cont [15/16] 0.0, 128
        %345 = vxpose.xlu0.b32.end [16/16] 0.0, 128
        %v346 = vpop.trf.xlu0
        %v347 = vpop.trf.xlu0
        %v348 = vpop.trf.xlu0
        %v349 = vpop.trf.xlu0
        %v350 = vpop.trf.xlu0
        %v351 = vpop.trf.xlu0
        %v352 = vpop.trf.xlu0
        %v353 = vpop.trf.xlu0
        %v354 = vpop.trf.xlu0
        %v355 = vpop.trf.xlu0
        %v356 = vpop.trf.xlu0
        %v357 = vpop.trf.xlu0
        %v358 = vpop.trf.xlu0
        %v359 = vpop.trf.xlu0
        %v360 = vpop.trf.xlu0
        %v361 = vpop.trf.xlu0
        %s362 = sld [smem:[#allocation2]]
        %s363 = sld [smem:[#allocation2 + $0x1]]
        %v364 = vstv %s362
        %v365 = vstv %s363
        %v366 = vsel %vm229, %v364, %v365
        %v367 = vld [vmem:[%s170] sm:$0x3]
        %v368 = vld [vmem:[%s170 + $0x8] sm:$0x3]
        %v369 = vld [vmem:[%s170] sm:$0xc]
        %v370 = vld [vmem:[%s170 + $0x8] sm:$0xc]
        %v371 = vmul.f32 %v366, %v367
        %v372 = vmul.f32 %v366, %v368
        %v373 = vadd.f32 %v232, %v371
        %v374 = vadd.f32 %v233, %v372
        %v375 = vmul.f32 %v369, 1.442695
        %v376 = vpow.pop %v375
        %v377 = vmul.f32 %v370, 1.442695
        %v378 = vpow.pop %v377
        %v381 = vrot.slane %v376, 2
        %v382 = vrot.slane %v378, 2
        %v385 = vmul.f32 %v366, %v381
        %v386 = vmul.f32 %v366, %v382
        %s387 = scalar_lea.vmem %s170, 4 [#allocation5]
        %v388 = vld [vmem:[%s387] ss:$8 sm:$0x3]
        %s389 = scalar_lea.vmem %s170, 5 [#allocation5]
        %v390 = vld [vmem:[%s389] ss:$8 sm:$0x3]
        %v391 = vsub.f32 %v390, %v388
        %v392 = vmul.f32 %v391, 0.5
        %v393 = vtanh.pop %v392
        %v394 = vadd.f32 %v393, 1.0
        %v395 = vmul.f32 %v394, 0.5
        %v398 = vrot.slane %v385, 6
        %v399 = vrot.slane %v386, 6
        %v403 = vperm.slane %v395, 0
        %v404 = vperm.slane %v395, 1
        %vm407 = vcmask 1041408
        %v408 = vsel %vm407, %v373, %v398
        %v409 = vsel %vm407, %v374, %v399
        %vm410 = vcmask 1043456
        %v411 = vsel %vm410, %v408, %v403
        %v412 = vsel %vm410, %v409, %v404
        %vm413 = vcmask 1044480
        %v414 = vsel %vm413, %v411, 0.0
        %v415 = vsel %vm413, %v412, 0.0
        %416 = vxpose.xlu0.b32.start [1/16] %v414, 128
        %417 = vxpose.xlu0.b32.cont [2/16] 0.0, 128
        %418 = vxpose.xlu0.b32.cont [3/16] 0.0, 128
        %419 = vxpose.xlu0.b32.cont [4/16] 0.0, 128
        %420 = vxpose.xlu0.b32.cont [5/16] 0.0, 128
        %421 = vxpose.xlu0.b32.cont [6/16] 0.0, 128
        %422 = vxpose.xlu0.b32.cont [7/16] 0.0, 128
        %423 = vxpose.xlu0.b32.cont [8/16] 0.0, 128
        %424 = vxpose.xlu0.b32.cont [9/16] 0.0, 128
        %425 = vxpose.xlu0.b32.cont [10/16] 0.0, 128
        %426 = vxpose.xlu0.b32.cont [11/16] 0.0, 128
        %427 = vxpose.xlu0.b32.cont [12/16] 0.0, 128
        %428 = vxpose.xlu0.b32.cont [13/16] 0.0, 128
        %429 = vxpose.xlu0.b32.cont [14/16] 0.0, 128
        %430 = vxpose.xlu0.b32.cont [15/16] 0.0, 128
        %431 = vxpose.xlu0.b32.end [16/16] 0.0, 128
        %v432 = vpop.trf.xlu0
        %v433 = vpop.trf.xlu0
        %v434 = vpop.trf.xlu0
        %v435 = vpop.trf.xlu0
        %v436 = vpop.trf.xlu0
        %v437 = vpop.trf.xlu0
        %v438 = vpop.trf.xlu0
        %v439 = vpop.trf.xlu0
        %v440 = vpop.trf.xlu0
        %v441 = vpop.trf.xlu0
        %v442 = vpop.trf.xlu0
        %v443 = vpop.trf.xlu0
        %v444 = vpop.trf.xlu0
        %v445 = vpop.trf.xlu0
        %v446 = vpop.trf.xlu0
        %v447 = vpop.trf.xlu0
        %448 = vxpose.xlu0.b32.start [1/16] %v415, 128
        %449 = vxpose.xlu0.b32.cont [2/16] 0.0, 128
        %450 = vxpose.xlu0.b32.cont [3/16] 0.0, 128
        %451 = vxpose.xlu0.b32.cont [4/16] 0.0, 128
        %452 = vxpose.xlu0.b32.cont [5/16] 0.0, 128
        %453 = vxpose.xlu0.b32.cont [6/16] 0.0, 128
        %454 = vxpose.xlu0.b32.cont [7/16] 0.0, 128
        %455 = vxpose.xlu0.b32.cont [8/16] 0.0, 128
        %456 = vxpose.xlu0.b32.cont [9/16] 0.0, 128
        %457 = vxpose.xlu0.b32.cont [10/16] 0.0, 128
        %458 = vxpose.xlu0.b32.cont [11/16] 0.0, 128
        %459 = vxpose.xlu0.b32.cont [12/16] 0.0, 128
        %460 = vxpose.xlu0.b32.cont [13/16] 0.0, 128
        %461 = vxpose.xlu0.b32.cont [14/16] 0.0, 128
        %462 = vxpose.xlu0.b32.cont [15/16] 0.0, 128
        %463 = vxpose.xlu0.b32.end [16/16] 0.0, 128
        %v464 = vpop.trf.xlu0
        %v465 = vpop.trf.xlu0
        %v466 = vpop.trf.xlu0
        %v467 = vpop.trf.xlu0
        %v468 = vpop.trf.xlu0
        %v469 = vpop.trf.xlu0
        %v470 = vpop.trf.xlu0
        %v471 = vpop.trf.xlu0
        %v472 = vpop.trf.xlu0
        %v473 = vpop.trf.xlu0
        %v474 = vpop.trf.xlu0
        %v475 = vpop.trf.xlu0
        %v476 = vpop.trf.xlu0
        %v477 = vpop.trf.xlu0
        %v478 = vpop.trf.xlu0
        %v479 = vpop.trf.xlu0
        %512 = vrot.lane.b32.xlu0 %v314, 6
        %v513 = vpop.permute.xlu0 %512
        %514 = vrot.lane.b32.xlu0 %v315, 6
        %v515 = vpop.permute.xlu0 %514
        %516 = vrot.lane.b32.xlu0 %v316, 6
        %v517 = vpop.permute.xlu0 %516
        %518 = vrot.lane.b32.xlu0 %v317, 6
        %v519 = vpop.permute.xlu0 %518
        %520 = vrot.lane.b32.xlu0 %v318, 6
        %v521 = vpop.permute.xlu0 %520
        %522 = vrot.lane.b32.xlu0 %v319, 6
        %v523 = vpop.permute.xlu0 %522
        %524 = vrot.lane.b32.xlu0 %v320, 6
        %v525 = vpop.permute.xlu0 %524
        %526 = vrot.lane.b32.xlu0 %v321, 6
        %v527 = vpop.permute.xlu0 %526
        %528 = vrot.lane.b32.xlu0 %v322, 6
        %v529 = vpop.permute.xlu0 %528
        %530 = vrot.lane.b32.xlu0 %v323, 6
        %v531 = vpop.permute.xlu0 %530
        %532 = vrot.lane.b32.xlu0 %v324, 6
        %v533 = vpop.permute.xlu0 %532
        %534 = vrot.lane.b32.xlu0 %v325, 6
        %v535 = vpop.permute.xlu0 %534
        %536 = vrot.lane.b32.xlu0 %v326, 6
        %v537 = vpop.permute.xlu0 %536
        %538 = vrot.lane.b32.xlu0 %v327, 6
        %v539 = vpop.permute.xlu0 %538
        %540 = vrot.lane.b32.xlu0 %v328, 6
        %v541 = vpop.permute.xlu0 %540
        %542 = vrot.lane.b32.xlu0 %v329, 6
        %v543 = vpop.permute.xlu0 %542
        %544 = vrot.lane.b32.xlu0 %v346, 6
        %v545 = vpop.permute.xlu0 %544
        %546 = vrot.lane.b32.xlu0 %v347, 6
        %v547 = vpop.permute.xlu0 %546
        %548 = vrot.lane.b32.xlu0 %v348, 6
        %v549 = vpop.permute.xlu0 %548
        %550 = vrot.lane.b32.xlu0 %v349, 6
        %v551 = vpop.permute.xlu0 %550
        %552 = vrot.lane.b32.xlu0 %v350, 6
        %v553 = vpop.permute.xlu0 %552
        %554 = vrot.lane.b32.xlu0 %v351, 6
        %v555 = vpop.permute.xlu0 %554
        %556 = vrot.lane.b32.xlu0 %v352, 6
        %v557 = vpop.permute.xlu0 %556
        %558 = vrot.lane.b32.xlu0 %v353, 6
        %v559 = vpop.permute.xlu0 %558
        %560 = vrot.lane.b32.xlu0 %v354, 6
        %v561 = vpop.permute.xlu0 %560
        %562 = vrot.lane.b32.xlu0 %v355, 6
        %v563 = vpop.permute.xlu0 %562
        %564 = vrot.lane.b32.xlu0 %v356, 6
        %v565 = vpop.permute.xlu0 %564
        %566 = vrot.lane.b32.xlu0 %v357, 6
        %v567 = vpop.permute.xlu0 %566
        %568 = vrot.lane.b32.xlu0 %v358, 6
        %v569 = vpop.permute.xlu0 %568
        %570 = vrot.lane.b32.xlu0 %v359, 6
        %v571 = vpop.permute.xlu0 %570
        %572 = vrot.lane.b32.xlu0 %v360, 6
        %v573 = vpop.permute.xlu0 %572
        %574 = vrot.lane.b32.xlu0 %v361, 6
        %v575 = vpop.permute.xlu0 %574
        %vm608 = vcmask 48128
        %v609 = vsel %vm608, %v432, %v513
        %v610 = vsel %vm608, %v433, %v515
        %v611 = vsel %vm608, %v434, %v517
        %v612 = vsel %vm608, %v435, %v519
        %v613 = vsel %vm608, %v436, %v521
        %v614 = vsel %vm608, %v437, %v523
        %v615 = vsel %vm608, %v438, %v525
        %v616 = vsel %vm608, %v439, %v527
        %v617 = vsel %vm608, %v440, %v529
        %v618 = vsel %vm608, %v441, %v531
        %v619 = vsel %vm608, %v442, %v533
        %v620 = vsel %vm608, %v443, %v535
        %v621 = vsel %vm608, %v444, %v537
        %v622 = vsel %vm608, %v445, %v539
        %v623 = vsel %vm608, %v446, %v541
        %v624 = vsel %vm608, %v447, %v543
        %v625 = vsel %vm608, %v464, %v545
        %v626 = vsel %vm608, %v465, %v547
        %v627 = vsel %vm608, %v466, %v549
        %v628 = vsel %vm608, %v467, %v551
        %v629 = vsel %vm608, %v468, %v553
        %v630 = vsel %vm608, %v469, %v555
        %v631 = vsel %vm608, %v470, %v557
        %v632 = vsel %vm608, %v471, %v559
        %v633 = vsel %vm608, %v472, %v561
        %v634 = vsel %vm608, %v473, %v563
        %v635 = vsel %vm608, %v474, %v565
        %v636 = vsel %vm608, %v475, %v567
        %v637 = vsel %vm608, %v476, %v569
        %v638 = vsel %vm608, %v477, %v571
        %v639 = vsel %vm608, %v478, %v573
        %v640 = vsel %vm608, %v479, %v575
        %vm641 = vcmask 310272
        %642 = vst.msk [vmem:[%s206] sm:$0xff] %vm641, %v609
        %643 = vst.msk [vmem:[%s206 + $0x8] sm:$0xff] %vm641, %v610
        %644 = vst.msk [vmem:[%s206 + $0x10] sm:$0xff] %vm641, %v611
        %645 = vst.msk [vmem:[%s206 + $0x18] sm:$0xff] %vm641, %v612
        %646 = vst.msk [vmem:[%s206 + $0x20] sm:$0xff] %vm641, %v613
        %647 = vst.msk [vmem:[%s206 + $0x28] sm:$0xff] %vm641, %v614
        %648 = vst.msk [vmem:[%s206 + $0x30] sm:$0xff] %vm641, %v615
        %649 = vst.msk [vmem:[%s206 + $0x38] sm:$0xff] %vm641, %v616
        %650 = vst.msk [vmem:[%s206 + $0x40] sm:$0xff] %vm641, %v617
        %651 = vst.msk [vmem:[%s206 + $0x48] sm:$0xff] %vm641, %v618
        %652 = vst.msk [vmem:[%s206 + $0x50] sm:$0xff] %vm641, %v619
        %653 = vst.msk [vmem:[%s206 + $0x58] sm:$0xff] %vm641, %v620
        %654 = vst.msk [vmem:[%s206 + $0x60] sm:$0xff] %vm641, %v621
        %655 = vst.msk [vmem:[%s206 + $0x68] sm:$0xff] %vm641, %v622
        %656 = vst.msk [vmem:[%s206 + $0x70] sm:$0xff] %vm641, %v623
        %657 = vst.msk [vmem:[%s206 + $0x78] sm:$0xff] %vm641, %v624
        %658 = vst.msk [vmem:[%s206 + $0x80] sm:$0xff] %vm641, %v625
        %659 = vst.msk [vmem:[%s206 + $0x88] sm:$0xff] %vm641, %v626
        %660 = vst.msk [vmem:[%s206 + $0x90] sm:$0xff] %vm641, %v627
        %661 = vst.msk [vmem:[%s206 + $0x98] sm:$0xff] %vm641, %v628
        %662 = vst.msk [vmem:[%s206 + $0xa0] sm:$0xff] %vm641, %v629
        %663 = vst.msk [vmem:[%s206 + $0xa8] sm:$0xff] %vm641, %v630
        %664 = vst.msk [vmem:[%s206 + $0xb0] sm:$0xff] %vm641, %v631
        %665 = vst.msk [vmem:[%s206 + $0xb8] sm:$0xff] %vm641, %v632
        %666 = vst.msk [vmem:[%s206 + $0xc0] sm:$0xff] %vm641, %v633
        %667 = vst.msk [vmem:[%s206 + $0xc8] sm:$0xff] %vm641, %v634
        %668 = vst.msk [vmem:[%s206 + $0xd0] sm:$0xff] %vm641, %v635
        %669 = vst.msk [vmem:[%s206 + $0xd8] sm:$0xff] %vm641, %v636
        %670 = vst.msk [vmem:[%s206 + $0xe0] sm:$0xff] %vm641, %v637
        %671 = vst.msk [vmem:[%s206 + $0xe8] sm:$0xff] %vm641, %v638
        %672 = vst.msk [vmem:[%s206 + $0xf0] sm:$0xff] %vm641, %v639
        %673 = vst.msk [vmem:[%s206 + $0xf8] sm:$0xff] %vm641, %v640
        %s674 = sld [smem:[#allocation2 + $0x80]]
        %s675 = sld [smem:[#allocation2 + $0x81]]
        %v676 = vstv %s674
        %v677 = vstv %s675
        %v678 = vsel %vm229, %v676, %v677
        %v679 = vld [vmem:[%s170] sm:$0xc0]
        %v680 = vld [vmem:[%s170 + $0x8] sm:$0xc0]
        %v681 = vld [vmem:[%s170 + $0x10] sm:$0x3]
        %v682 = vld [vmem:[%s170 + $0x18] sm:$0x3]
        %v685 = vrot.slane %v679, 6
        %v686 = vrot.slane %v680, 6
        %v689 = vmul.f32 %v678, %v685
        %v690 = vmul.f32 %v678, %v686
        %v691 = vadd.f32 %v232, %v689
        %v692 = vadd.f32 %v233, %v690
        %v693 = vmul.f32 %v681, 1.442695
        %v694 = vpow.pop %v693
        %v695 = vmul.f32 %v682, 1.442695
        %v696 = vpow.pop %v695
        %v697 = vmul.f32 %v678, %v694
        %v698 = vmul.f32 %v678, %v696
        %s699 = scalar_lea.vmem %s170, 18 [#allocation5]
        %v700 = vld [vmem:[%s699] ss:$8 sm:$0x3]
        %s701 = scalar_lea.vmem %s170, 19 [#allocation5]
        %v702 = vld [vmem:[%s701] ss:$8 sm:$0x3]
        %v703 = vsub.f32 %v702, %v700
        %v704 = vmul.f32 %v703, 0.5
        %v705 = vtanh.pop %v704
        %v706 = vadd.f32 %v705, 1.0
        %v707 = vmul.f32 %v706, 0.5
        %v710 = vrot.slane %v697, 6
        %v711 = vrot.slane %v698, 6
        %v715 = vperm.slane %v707, 0
        %v716 = vperm.slane %v707, 1
        %v719 = vsel %vm407, %v691, %v710
        %v720 = vsel %vm407, %v692, %v711
        %v721 = vsel %vm410, %v719, %v715
        %v722 = vsel %vm410, %v720, %v716
        %v723 = vsel %vm413, %v721, 0.0
        %v724 = vsel %vm413, %v722, 0.0
        %725 = vxpose.xlu0.b32.start [1/16] %v723, 128
        %726 = vxpose.xlu0.b32.cont [2/16] 0.0, 128
        %727 = vxpose.xlu0.b32.cont [3/16] 0.0, 128
        %728 = vxpose.xlu0.b32.cont [4/16] 0.0, 128
        %729 = vxpose.xlu0.b32.cont [5/16] 0.0, 128
        %730 = vxpose.xlu0.b32.cont [6/16] 0.0, 128
        %731 = vxpose.xlu0.b32.cont [7/16] 0.0, 128
        %732 = vxpose.xlu0.b32.cont [8/16] 0.0, 128
        %733 = vxpose.xlu0.b32.cont [9/16] 0.0, 128
        %734 = vxpose.xlu0.b32.cont [10/16] 0.0, 128
        %735 = vxpose.xlu0.b32.cont [11/16] 0.0, 128
        %736 = vxpose.xlu0.b32.cont [12/16] 0.0, 128
        %737 = vxpose.xlu0.b32.cont [13/16] 0.0, 128
        %738 = vxpose.xlu0.b32.cont [14/16] 0.0, 128
        %739 = vxpose.xlu0.b32.cont [15/16] 0.0, 128
        %740 = vxpose.xlu0.b32.end [16/16] 0.0, 128
        %v741 = vpop.trf.xlu0
        %v742 = vpop.trf.xlu0
        %v743 = vpop.trf.xlu0
        %v744 = vpop.trf.xlu0
        %v745 = vpop.trf.xlu0
        %v746 = vpop.trf.xlu0
        %v747 = vpop.trf.xlu0
        %v748 = vpop.trf.xlu0
        %v749 = vpop.trf.xlu0
        %v750 = vpop.trf.xlu0
        %v751 = vpop.trf.xlu0
        %v752 = vpop.trf.xlu0
        %v753 = vpop.trf.xlu0
        %v754 = vpop.trf.xlu0
        %v755 = vpop.trf.xlu0
        %v756 = vpop.trf.xlu0
        %757 = vxpose.xlu0.b32.start [1/16] %v724, 128
        %758 = vxpose.xlu0.b32.cont [2/16] 0.0, 128
        %759 = vxpose.xlu0.b32.cont [3/16] 0.0, 128
        %760 = vxpose.xlu0.b32.cont [4/16] 0.0, 128
        %761 = vxpose.xlu0.b32.cont [5/16] 0.0, 128
        %762 = vxpose.xlu0.b32.cont [6/16] 0.0, 128
        %763 = vxpose.xlu0.b32.cont [7/16] 0.0, 128
        %764 = vxpose.xlu0.b32.cont [8/16] 0.0, 128
        %765 = vxpose.xlu0.b32.cont [9/16] 0.0, 128
        %766 = vxpose.xlu0.b32.cont [10/16] 0.0, 128
        %767 = vxpose.xlu0.b32.cont [11/16] 0.0, 128
        %768 = vxpose.xlu0.b32.cont [12/16] 0.0, 128
        %769 = vxpose.xlu0.b32.cont [13/16] 0.0, 128
        %770 = vxpose.xlu0.b32.cont [14/16] 0.0, 128
        %771 = vxpose.xlu0.b32.cont [15/16] 0.0, 128
        %772 = vxpose.xlu0.b32.end [16/16] 0.0, 128
        %v773 = vpop.trf.xlu0
        %v774 = vpop.trf.xlu0
        %v775 = vpop.trf.xlu0
        %v776 = vpop.trf.xlu0
        %v777 = vpop.trf.xlu0
        %v778 = vpop.trf.xlu0
        %v779 = vpop.trf.xlu0
        %v780 = vpop.trf.xlu0
        %v781 = vpop.trf.xlu0
        %v782 = vpop.trf.xlu0
        %v783 = vpop.trf.xlu0
        %v784 = vpop.trf.xlu0
        %v785 = vpop.trf.xlu0
        %v786 = vpop.trf.xlu0
        %v787 = vpop.trf.xlu0
        %v788 = vpop.trf.xlu0
        %v789 = vsel %vm608, %v741, %v513
        %v790 = vsel %vm608, %v742, %v515
        %v791 = vsel %vm608, %v743, %v517
        %v792 = vsel %vm608, %v744, %v519
        %v793 = vsel %vm608, %v745, %v521
        %v794 = vsel %vm608, %v746, %v523
        %v795 = vsel %vm608, %v747, %v525
        %v796 = vsel %vm608, %v748, %v527
        %v797 = vsel %vm608, %v749, %v529
        %v798 = vsel %vm608, %v750, %v531
        %v799 = vsel %vm608, %v751, %v533
        %v800 = vsel %vm608, %v752, %v535
        %v801 = vsel %vm608, %v753, %v537
        %v802 = vsel %vm608, %v754, %v539
        %v803 = vsel %vm608, %v755, %v541
        %v804 = vsel %vm608, %v756, %v543
        %v805 = vsel %vm608, %v773, %v545
        %v806 = vsel %vm608, %v774, %v547
        %v807 = vsel %vm608, %v775, %v549
        %v808 = vsel %vm608, %v776, %v551
        %v809 = vsel %vm608, %v777, %v553
        %v810 = vsel %vm608, %v778, %v555
        %v811 = vsel %vm608, %v779, %v557
        %v812 = vsel %vm608, %v780, %v559
        %v813 = vsel %vm608, %v781, %v561
        %v814 = vsel %vm608, %v782, %v563
        %v815 = vsel %vm608, %v783, %v565
        %v816 = vsel %vm608, %v784, %v567
        %v817 = vsel %vm608, %v785, %v569
        %v818 = vsel %vm608, %v786, %v571
        %v819 = vsel %vm608, %v787, %v573
        %v820 = vsel %vm608, %v788, %v575
        %s821 = scalar_lea.vmem %s206, 256
        %822 = vst.msk [vmem:[%s821] sm:$0xff] %vm641, %v789
        %823 = vst.msk [vmem:[%s821 + $0x8] sm:$0xff] %vm641, %v790
        %824 = vst.msk [vmem:[%s821 + $0x10] sm:$0xff] %vm641, %v791
        %825 = vst.msk [vmem:[%s821 + $0x18] sm:$0xff] %vm641, %v792
        %826 = vst.msk [vmem:[%s821 + $0x20] sm:$0xff] %vm641, %v793
        %827 = vst.msk [vmem:[%s821 + $0x28] sm:$0xff] %vm641, %v794
        %828 = vst.msk [vmem:[%s821 + $0x30] sm:$0xff] %vm641, %v795
        %829 = vst.msk [vmem:[%s821 + $0x38] sm:$0xff] %vm641, %v796
        %830 = vst.msk [vmem:[%s821 + $0x40] sm:$0xff] %vm641, %v797
        %831 = vst.msk [vmem:[%s821 + $0x48] sm:$0xff] %vm641, %v798
        %832 = vst.msk [vmem:[%s821 + $0x50] sm:$0xff] %vm641, %v799
        %833 = vst.msk [vmem:[%s821 + $0x58] sm:$0xff] %vm641, %v800
        %834 = vst.msk [vmem:[%s821 + $0x60] sm:$0xff] %vm641, %v801
        %835 = vst.msk [vmem:[%s821 + $0x68] sm:$0xff] %vm641, %v802
        %836 = vst.msk [vmem:[%s821 + $0x70] sm:$0xff] %vm641, %v803
        %837 = vst.msk [vmem:[%s821 + $0x78] sm:$0xff] %vm641, %v804
        %838 = vst.msk [vmem:[%s821 + $0x80] sm:$0xff] %vm641, %v805
        %839 = vst.msk [vmem:[%s821 + $0x88] sm:$0xff] %vm641, %v806
        %840 = vst.msk [vmem:[%s821 + $0x90] sm:$0xff] %vm641, %v807
        %841 = vst.msk [vmem:[%s821 + $0x98] sm:$0xff] %vm641, %v808
        %842 = vst.msk [vmem:[%s821 + $0xa0] sm:$0xff] %vm641, %v809
        %843 = vst.msk [vmem:[%s821 + $0xa8] sm:$0xff] %vm641, %v810
        %844 = vst.msk [vmem:[%s821 + $0xb0] sm:$0xff] %vm641, %v811
        %845 = vst.msk [vmem:[%s821 + $0xb8] sm:$0xff] %vm641, %v812
        %846 = vst.msk [vmem:[%s821 + $0xc0] sm:$0xff] %vm641, %v813
        %847 = vst.msk [vmem:[%s821 + $0xc8] sm:$0xff] %vm641, %v814
        %848 = vst.msk [vmem:[%s821 + $0xd0] sm:$0xff] %vm641, %v815
        %849 = vst.msk [vmem:[%s821 + $0xd8] sm:$0xff] %vm641, %v816
        %850 = vst.msk [vmem:[%s821 + $0xe0] sm:$0xff] %vm641, %v817
        %851 = vst.msk [vmem:[%s821 + $0xe8] sm:$0xff] %vm641, %v818
        %852 = vst.msk [vmem:[%s821 + $0xf0] sm:$0xff] %vm641, %v819
        %853 = vst.msk [vmem:[%s821 + $0xf8] sm:$0xff] %vm641, %v820
        %s854 = sld [smem:[#allocation2 + $0x100]]
        %s855 = sld [smem:[#allocation2 + $0x101]]
        %v856 = vstv %s854
        %v857 = vstv %s855
        %v858 = vsel %vm229, %v856, %v857
        %v859 = vld [vmem:[%s170 + $0x10] sm:$0x30]
        %v860 = vld [vmem:[%s170 + $0x18] sm:$0x30]
        %v861 = vld [vmem:[%s170 + $0x10] sm:$0xc0]
        %v862 = vld [vmem:[%s170 + $0x18] sm:$0xc0]
        %v865 = vrot.slane %v859, 4
        %v866 = vrot.slane %v860, 4
        %v869 = vmul.f32 %v858, %v865
        %v870 = vmul.f32 %v858, %v866
        %v871 = vadd.f32 %v232, %v869
        %v872 = vadd.f32 %v233, %v870
        %v873 = vmul.f32 %v861, 1.442695
        %v874 = vpow.pop %v873
        %v875 = vmul.f32 %v862, 1.442695
        %v876 = vpow.pop %v875
        %v879 = vrot.slane %v874, 6
        %v880 = vrot.slane %v876, 6
        %v883 = vmul.f32 %v858, %v879
        %v884 = vmul.f32 %v858, %v880
        %s885 = scalar_lea.vmem %s170, 32 [#allocation5]
        %v886 = vld [vmem:[%s885] ss:$8 sm:$0x3]
        %s887 = scalar_lea.vmem %s170, 33 [#allocation5]
        %v888 = vld [vmem:[%s887] ss:$8 sm:$0x3]
        %v889 = vsub.f32 %v888, %v886
        %v890 = vmul.f32 %v889, 0.5
        %v891 = vtanh.pop %v890
        %v892 = vadd.f32 %v891, 1.0
        %v893 = vmul.f32 %v892, 0.5
        %v896 = vrot.slane %v883, 6
        %v897 = vrot.slane %v884, 6
        %v901 = vperm.slane %v893, 0
        %v902 = vperm.slane %v893, 1
        %v905 = vsel %vm407, %v871, %v896
        %v906 = vsel %vm407, %v872, %v897
        %v907 = vsel %vm410, %v905, %v901
        %v908 = vsel %vm410, %v906, %v902
        %v909 = vsel %vm413, %v907, 0.0
        %v910 = vsel %vm413, %v908, 0.0
        %911 = vxpose.xlu0.b32.start [1/16] %v909, 128
        %912 = vxpose.xlu0.b32.cont [2/16] 0.0, 128
        %913 = vxpose.xlu0.b32.cont [3/16] 0.0, 128
        %914 = vxpose.xlu0.b32.cont [4/16] 0.0, 128
        %915 = vxpose.xlu0.b32.cont [5/16] 0.0, 128
        %916 = vxpose.xlu0.b32.cont [6/16] 0.0, 128
        %917 = vxpose.xlu0.b32.cont [7/16] 0.0, 128
        %918 = vxpose.xlu0.b32.cont [8/16] 0.0, 128
        %919 = vxpose.xlu0.b32.cont [9/16] 0.0, 128
        %920 = vxpose.xlu0.b32.cont [10/16] 0.0, 128
        %921 = vxpose.xlu0.b32.cont [11/16] 0.0, 128
        %922 = vxpose.xlu0.b32.cont [12/16] 0.0, 128
        %923 = vxpose.xlu0.b32.cont [13/16] 0.0, 128
        %924 = vxpose.xlu0.b32.cont [14/16] 0.0, 128
        %925 = vxpose.xlu0.b32.cont [15/16] 0.0, 128
        %926 = vxpose.xlu0.b32.end [16/16] 0.0, 128
        %v927 = vpop.trf.xlu0
        %v928 = vpop.trf.xlu0
        %v929 = vpop.trf.xlu0
        %v930 = vpop.trf.xlu0
        %v931 = vpop.trf.xlu0
        %v932 = vpop.trf.xlu0
        %v933 = vpop.trf.xlu0
        %v934 = vpop.trf.xlu0
        %v935 = vpop.trf.xlu0
        %v936 = vpop.trf.xlu0
        %v937 = vpop.trf.xlu0
        %v938 = vpop.trf.xlu0
        %v939 = vpop.trf.xlu0
        %v940 = vpop.trf.xlu0
        %v941 = vpop.trf.xlu0
        %v942 = vpop.trf.xlu0
        %943 = vxpose.xlu0.b32.start [1/16] %v910, 128
        %944 = vxpose.xlu0.b32.cont [2/16] 0.0, 128
        %945 = vxpose.xlu0.b32.cont [3/16] 0.0, 128
        %946 = vxpose.xlu0.b32.cont [4/16] 0.0, 128
        %947 = vxpose.xlu0.b32.cont [5/16] 0.0, 128
        %948 = vxpose.xlu0.b32.cont [6/16] 0.0, 128
        %949 = vxpose.xlu0.b32.cont [7/16] 0.0, 128
        %950 = vxpose.xlu0.b32.cont [8/16] 0.0, 128
        %951 = vxpose.xlu0.b32.cont [9/16] 0.0, 128
        %952 = vxpose.xlu0.b32.cont [10/16] 0.0, 128
        %953 = vxpose.xlu0.b32.cont [11/16] 0.0, 128
        %954 = vxpose.xlu0.b32.cont [12/16] 0.0, 128
        %955 = vxpose.xlu0.b32.cont [13/16] 0.0, 128
        %956 = vxpose.xlu0.b32.cont [14/16] 0.0, 128
        %957 = vxpose.xlu0.b32.cont [15/16] 0.0, 128
        %958 = vxpose.xlu0.b32.end [16/16] 0.0, 128
        %v959 = vpop.trf.xlu0
        %v960 = vpop.trf.xlu0
        %v961 = vpop.trf.xlu0
        %v962 = vpop.trf.xlu0
        %v963 = vpop.trf.xlu0
        %v964 = vpop.trf.xlu0
        %v965 = vpop.trf.xlu0
        %v966 = vpop.trf.xlu0
        %v967 = vpop.trf.xlu0
        %v968 = vpop.trf.xlu0
        %v969 = vpop.trf.xlu0
        %v970 = vpop.trf.xlu0
        %v971 = vpop.trf.xlu0
        %v972 = vpop.trf.xlu0
        %v973 = vpop.trf.xlu0
        %v974 = vpop.trf.xlu0
        %v975 = vsel %vm608, %v927, %v513
        %v976 = vsel %vm608, %v928, %v515
        %v977 = vsel %vm608, %v929, %v517
        %v978 = vsel %vm608, %v930, %v519
        %v979 = vsel %vm608, %v931, %v521
        %v980 = vsel %vm608, %v932, %v523
        %v981 = vsel %vm608, %v933, %v525
        %v982 = vsel %vm608, %v934, %v527
        %v983 = vsel %vm608, %v935, %v529
        %v984 = vsel %vm608, %v936, %v531
        %v985 = vsel %vm608, %v937, %v533
        %v986 = vsel %vm608, %v938, %v535
        %v987 = vsel %vm608, %v939, %v537
        %v988 = vsel %vm608, %v940, %v539
        %v989 = vsel %vm608, %v941, %v541
        %v990 = vsel %vm608, %v942, %v543
        %v991 = vsel %vm608, %v959, %v545
        %v992 = vsel %vm608, %v960, %v547
        %v993 = vsel %vm608, %v961, %v549
        %v994 = vsel %vm608, %v962, %v551
        %v995 = vsel %vm608, %v963, %v553
        %v996 = vsel %vm608, %v964, %v555
        %v997 = vsel %vm608, %v965, %v557
        %v998 = vsel %vm608, %v966, %v559
        %v999 = vsel %vm608, %v967, %v561
        %v1000 = vsel %vm608, %v968, %v563
        %v1001 = vsel %vm608, %v969, %v565
        %v1002 = vsel %vm608, %v970, %v567
        %v1003 = vsel %vm608, %v971, %v569
        %v1004 = vsel %vm608, %v972, %v571
        %v1005 = vsel %vm608, %v973, %v573
        %v1006 = vsel %vm608, %v974, %v575
        %s1007 = scalar_lea.vmem %s206, 512
        %1008 = vst.msk [vmem:[%s1007] sm:$0xff] %vm641, %v975
        %1009 = vst.msk [vmem:[%s1007 + $0x8] sm:$0xff] %vm641, %v976
        %1010 = vst.msk [vmem:[%s1007 + $0x10] sm:$0xff] %vm641, %v977
        %1011 = vst.msk [vmem:[%s1007 + $0x18] sm:$0xff] %vm641, %v978
        %1012 = vst.msk [vmem:[%s1007 + $0x20] sm:$0xff] %vm641, %v979
        %1013 = vst.msk [vmem:[%s1007 + $0x28] sm:$0xff] %vm641, %v980
        %1014 = vst.msk [vmem:[%s1007 + $0x30] sm:$0xff] %vm641, %v981
        %1015 = vst.msk [vmem:[%s1007 + $0x38] sm:$0xff] %vm641, %v982
        %1016 = vst.msk [vmem:[%s1007 + $0x40] sm:$0xff] %vm641, %v983
        %1017 = vst.msk [vmem:[%s1007 + $0x48] sm:$0xff] %vm641, %v984
        %1018 = vst.msk [vmem:[%s1007 + $0x50] sm:$0xff] %vm641, %v985
        %1019 = vst.msk [vmem:[%s1007 + $0x58] sm:$0xff] %vm641, %v986
        %1020 = vst.msk [vmem:[%s1007 + $0x60] sm:$0xff] %vm641, %v987
        %1021 = vst.msk [vmem:[%s1007 + $0x68] sm:$0xff] %vm641, %v988
        %1022 = vst.msk [vmem:[%s1007 + $0x70] sm:$0xff] %vm641, %v989
        %1023 = vst.msk [vmem:[%s1007 + $0x78] sm:$0xff] %vm641, %v990
        %1024 = vst.msk [vmem:[%s1007 + $0x80] sm:$0xff] %vm641, %v991
        %1025 = vst.msk [vmem:[%s1007 + $0x88] sm:$0xff] %vm641, %v992
        %1026 = vst.msk [vmem:[%s1007 + $0x90] sm:$0xff] %vm641, %v993
        %1027 = vst.msk [vmem:[%s1007 + $0x98] sm:$0xff] %vm641, %v994
        %1028 = vst.msk [vmem:[%s1007 + $0xa0] sm:$0xff] %vm641, %v995
        %1029 = vst.msk [vmem:[%s1007 + $0xa8] sm:$0xff] %vm641, %v996
        %1030 = vst.msk [vmem:[%s1007 + $0xb0] sm:$0xff] %vm641, %v997
        %1031 = vst.msk [vmem:[%s1007 + $0xb8] sm:$0xff] %vm641, %v998
        %1032 = vst.msk [vmem:[%s1007 + $0xc0] sm:$0xff] %vm641, %v999
        %1033 = vst.msk [vmem:[%s1007 + $0xc8] sm:$0xff] %vm641, %v1000
        %1034 = vst.msk [vmem:[%s1007 + $0xd0] sm:$0xff] %vm641, %v1001
        %1035 = vst.msk [vmem:[%s1007 + $0xd8] sm:$0xff] %vm641, %v1002
        %1036 = vst.msk [vmem:[%s1007 + $0xe0] sm:$0xff] %vm641, %v1003
        %1037 = vst.msk [vmem:[%s1007 + $0xe8] sm:$0xff] %vm641, %v1004
        %1038 = vst.msk [vmem:[%s1007 + $0xf0] sm:$0xff] %vm641, %v1005
        %1039 = vst.msk [vmem:[%s1007 + $0xf8] sm:$0xff] %vm641, %v1006
        %s1040 = sld [smem:[#allocation2 + $0x180]]
        %s1041 = sld [smem:[#allocation2 + $0x181]]
        %v1042 = vstv %s1040
        %v1043 = vstv %s1041
        %v1044 = vsel %vm229, %v1042, %v1043
        %v1045 = vld [vmem:[%s170 + $0x20] sm:$0xc]
        %v1046 = vld [vmem:[%s170 + $0x28] sm:$0xc]
        %v1047 = vld [vmem:[%s170 + $0x20] sm:$0x30]
        %v1048 = vld [vmem:[%s170 + $0x28] sm:$0x30]
        %v1051 = vrot.slane %v1045, 2
        %v1052 = vrot.slane %v1046, 2
        %v1055 = vmul.f32 %v1044, %v1051
        %v1056 = vmul.f32 %v1044, %v1052
        %v1057 = vadd.f32 %v232, %v1055
        %v1058 = vadd.f32 %v233, %v1056
        %v1059 = vmul.f32 %v1047, 1.442695
        %v1060 = vpow.pop %v1059
        %v1061 = vmul.f32 %v1048, 1.442695
        %v1062 = vpow.pop %v1061
        %v1065 = vrot.slane %v1060, 4
        %v1066 = vrot.slane %v1062, 4
        %v1069 = vmul.f32 %v1044, %v1065
        %v1070 = vmul.f32 %v1044, %v1066
        %s1071 = scalar_lea.vmem %s170, 38 [#allocation5]
        %v1072 = vld [vmem:[%s1071] ss:$8 sm:$0x3]
        %s1073 = scalar_lea.vmem %s170, 39 [#allocation5]
        %v1074 = vld [vmem:[%s1073] ss:$8 sm:$0x3]
        %v1075 = vsub.f32 %v1074, %v1072
        %v1076 = vmul.f32 %v1075, 0.5
        %v1077 = vtanh.pop %v1076
        %v1078 = vadd.f32 %v1077, 1.0
        %v1079 = vmul.f32 %v1078, 0.5
        %v1082 = vrot.slane %v1069, 6
        %v1083 = vrot.slane %v1070, 6
        %v1087 = vperm.slane %v1079, 0
        %v1088 = vperm.slane %v1079, 1
        %v1091 = vsel %vm407, %v1057, %v1082
        %v1092 = vsel %vm407, %v1058, %v1083
        %v1093 = vsel %vm410, %v1091, %v1087
        %v1094 = vsel %vm410, %v1092, %v1088
        %v1095 = vsel %vm413, %v1093, 0.0
        %v1096 = vsel %vm413, %v1094, 0.0
        %1097 = vxpose.xlu0.b32.start [1/16] %v1095, 128
        %1098 = vxpose.xlu0.b32.cont [2/16] 0.0, 128
        %1099 = vxpose.xlu0.b32.cont [3/16] 0.0, 128
        %1100 = vxpose.xlu0.b32.cont [4/16] 0.0, 128
        %1101 = vxpose.xlu0.b32.cont [5/16] 0.0, 128
        %1102 = vxpose.xlu0.b32.cont [6/16] 0.0, 128
        %1103 = vxpose.xlu0.b32.cont [7/16] 0.0, 128
        %1104 = vxpose.xlu0.b32.cont [8/16] 0.0, 128
        %1105 = vxpose.xlu0.b32.cont [9/16] 0.0, 128
        %1106 = vxpose.xlu0.b32.cont [10/16] 0.0, 128
        %1107 = vxpose.xlu0.b32.cont [11/16] 0.0, 128
        %1108 = vxpose.xlu0.b32.cont [12/16] 0.0, 128
        %1109 = vxpose.xlu0.b32.cont [13/16] 0.0, 128
        %1110 = vxpose.xlu0.b32.cont [14/16] 0.0, 128
        %1111 = vxpose.xlu0.b32.cont [15/16] 0.0, 128
        %1112 = vxpose.xlu0.b32.end [16/16] 0.0, 128
        %v1113 = vpop.trf.xlu0
        %v1114 = vpop.trf.xlu0
        %v1115 = vpop.trf.xlu0
        %v1116 = vpop.trf.xlu0
        %v1117 = vpop.trf.xlu0
        %v1118 = vpop.trf.xlu0
        %v1119 = vpop.trf.xlu0
        %v1120 = vpop.trf.xlu0
        %v1121 = vpop.trf.xlu0
        %v1122 = vpop.trf.xlu0
        %v1123 = vpop.trf.xlu0
        %v1124 = vpop.trf.xlu0
        %v1125 = vpop.trf.xlu0
        %v1126 = vpop.trf.xlu0
        %v1127 = vpop.trf.xlu0
        %v1128 = vpop.trf.xlu0
        %1129 = vxpose.xlu0.b32.start [1/16] %v1096, 128
        %1130 = vxpose.xlu0.b32.cont [2/16] 0.0, 128
        %1131 = vxpose.xlu0.b32.cont [3/16] 0.0, 128
        %1132 = vxpose.xlu0.b32.cont [4/16] 0.0, 128
        %1133 = vxpose.xlu0.b32.cont [5/16] 0.0, 128
        %1134 = vxpose.xlu0.b32.cont [6/16] 0.0, 128
        %1135 = vxpose.xlu0.b32.cont [7/16] 0.0, 128
        %1136 = vxpose.xlu0.b32.cont [8/16] 0.0, 128
        %1137 = vxpose.xlu0.b32.cont [9/16] 0.0, 128
        %1138 = vxpose.xlu0.b32.cont [10/16] 0.0, 128
        %1139 = vxpose.xlu0.b32.cont [11/16] 0.0, 128
        %1140 = vxpose.xlu0.b32.cont [12/16] 0.0, 128
        %1141 = vxpose.xlu0.b32.cont [13/16] 0.0, 128
        %1142 = vxpose.xlu0.b32.cont [14/16] 0.0, 128
        %1143 = vxpose.xlu0.b32.cont [15/16] 0.0, 128
        %1144 = vxpose.xlu0.b32.end [16/16] 0.0, 128
        %v1145 = vpop.trf.xlu0
        %v1146 = vpop.trf.xlu0
        %v1147 = vpop.trf.xlu0
        %v1148 = vpop.trf.xlu0
        %v1149 = vpop.trf.xlu0
        %v1150 = vpop.trf.xlu0
        %v1151 = vpop.trf.xlu0
        %v1152 = vpop.trf.xlu0
        %v1153 = vpop.trf.xlu0
        %v1154 = vpop.trf.xlu0
        %v1155 = vpop.trf.xlu0
        %v1156 = vpop.trf.xlu0
        %v1157 = vpop.trf.xlu0
        %v1158 = vpop.trf.xlu0
        %v1159 = vpop.trf.xlu0
        %v1160 = vpop.trf.xlu0
        %v1161 = vsel %vm608, %v1113, %v513
        %v1162 = vsel %vm608, %v1114, %v515
        %v1163 = vsel %vm608, %v1115, %v517
        %v1164 = vsel %vm608, %v1116, %v519
        %v1165 = vsel %vm608, %v1117, %v521
        %v1166 = vsel %vm608, %v1118, %v523
        %v1167 = vsel %vm608, %v1119, %v525
        %v1168 = vsel %vm608, %v1120, %v527
        %v1169 = vsel %vm608, %v1121, %v529
        %v1170 = vsel %vm608, %v1122, %v531
        %v1171 = vsel %vm608, %v1123, %v533
        %v1172 = vsel %vm608, %v1124, %v535
        %v1173 = vsel %vm608, %v1125, %v537
        %v1174 = vsel %vm608, %v1126, %v539
        %v1175 = vsel %vm608, %v1127, %v541
        %v1176 = vsel %vm608, %v1128, %v543
        %v1177 = vsel %vm608, %v1145, %v545
        %v1178 = vsel %vm608, %v1146, %v547
        %v1179 = vsel %vm608, %v1147, %v549
        %v1180 = vsel %vm608, %v1148, %v551
        %v1181 = vsel %vm608, %v1149, %v553
        %v1182 = vsel %vm608, %v1150, %v555
        %v1183 = vsel %vm608, %v1151, %v557
        %v1184 = vsel %vm608, %v1152, %v559
        %v1185 = vsel %vm608, %v1153, %v561
        %v1186 = vsel %vm608, %v1154, %v563
        %v1187 = vsel %vm608, %v1155, %v565
        %v1188 = vsel %vm608, %v1156, %v567
        %v1189 = vsel %vm608, %v1157, %v569
        %v1190 = vsel %vm608, %v1158, %v571
        %v1191 = vsel %vm608, %v1159, %v573
        %v1192 = vsel %vm608, %v1160, %v575
        %s1193 = scalar_lea.vmem %s206, 768
        %1194 = vst.msk [vmem:[%s1193] sm:$0xff] %vm641, %v1161
        %1195 = vst.msk [vmem:[%s1193 + $0x8] sm:$0xff] %vm641, %v1162
        %1196 = vst.msk [vmem:[%s1193 + $0x10] sm:$0xff] %vm641, %v1163
        %1197 = vst.msk [vmem:[%s1193 + $0x18] sm:$0xff] %vm641, %v1164
        %1198 = vst.msk [vmem:[%s1193 + $0x20] sm:$0xff] %vm641, %v1165
        %1199 = vst.msk [vmem:[%s1193 + $0x28] sm:$0xff] %vm641, %v1166
        %1200 = vst.msk [vmem:[%s1193 + $0x30] sm:$0xff] %vm641, %v1167
        %1201 = vst.msk [vmem:[%s1193 + $0x38] sm:$0xff] %vm641, %v1168
        %1202 = vst.msk [vmem:[%s1193 + $0x40] sm:$0xff] %vm641, %v1169
        %1203 = vst.msk [vmem:[%s1193 + $0x48] sm:$0xff] %vm641, %v1170
        %1204 = vst.msk [vmem:[%s1193 + $0x50] sm:$0xff] %vm641, %v1171
        %1205 = vst.msk [vmem:[%s1193 + $0x58] sm:$0xff] %vm641, %v1172
        %1206 = vst.msk [vmem:[%s1193 + $0x60] sm:$0xff] %vm641, %v1173
        %1207 = vst.msk [vmem:[%s1193 + $0x68] sm:$0xff] %vm641, %v1174
        %1208 = vst.msk [vmem:[%s1193 + $0x70] sm:$0xff] %vm641, %v1175
        %1209 = vst.msk [vmem:[%s1193 + $0x78] sm:$0xff] %vm641, %v1176
        %1210 = vst.msk [vmem:[%s1193 + $0x80] sm:$0xff] %vm641, %v1177
        %1211 = vst.msk [vmem:[%s1193 + $0x88] sm:$0xff] %vm641, %v1178
        %1212 = vst.msk [vmem:[%s1193 + $0x90] sm:$0xff] %vm641, %v1179
        %1213 = vst.msk [vmem:[%s1193 + $0x98] sm:$0xff] %vm641, %v1180
        %1214 = vst.msk [vmem:[%s1193 + $0xa0] sm:$0xff] %vm641, %v1181
        %1215 = vst.msk [vmem:[%s1193 + $0xa8] sm:$0xff] %vm641, %v1182
        %1216 = vst.msk [vmem:[%s1193 + $0xb0] sm:$0xff] %vm641, %v1183
        %1217 = vst.msk [vmem:[%s1193 + $0xb8] sm:$0xff] %vm641, %v1184
        %1218 = vst.msk [vmem:[%s1193 + $0xc0] sm:$0xff] %vm641, %v1185
        %1219 = vst.msk [vmem:[%s1193 + $0xc8] sm:$0xff] %vm641, %v1186
        %1220 = vst.msk [vmem:[%s1193 + $0xd0] sm:$0xff] %vm641, %v1187
        %1221 = vst.msk [vmem:[%s1193 + $0xd8] sm:$0xff] %vm641, %v1188
        %1222 = vst.msk [vmem:[%s1193 + $0xe0] sm:$0xff] %vm641, %v1189
        %1223 = vst.msk [vmem:[%s1193 + $0xe8] sm:$0xff] %vm641, %v1190
        %1224 = vst.msk [vmem:[%s1193 + $0xf0] sm:$0xff] %vm641, %v1191
        %1225 = vst.msk [vmem:[%s1193 + $0xf8] sm:$0xff] %vm641, %v1192
        %s1226 = smul.u32 32, %s21
        %p1227 = scmp.lt.s32.totalorder %s22, 1
        %s1228 = scalar_select %p1227, %s22, 1
        %p1229 = scmp.lt.s32.totalorder %s1226, 31
        %s1230 = scalar_select %p1229, %s1226, 31
        %s1231 = smul.addr %s1228, 128
        %s1232 = sadd.s32 %s1230, %s1231
        %s1233 = smul.addr %s1232, 8
        %s1234 = scalar_lea.vmem %s2, %s1233
        // Predicated region
        $region37: #{tpu_custom_call.1} parent=27 // pred_check
          %p1235 = pneg %p98
        $region38: #{tpu_custom_call.1} parent=27 // pred_check_branch
          %1237 = sbr.rel (%p1235) target = $region40
        $region39: #{tpu_custom_call.1} parent=27 // pred_region
          %s1238 = smul.u32 32, %s21
        $region40: #{tpu_custom_call.1} parent=27 // pred_fallthru
          _
      $region28: #{tpu_custom_call.1} parent=5 // pred_fallthru
        _
      %p1239 = scmp.le.s32.totalorder 2, %s12
      // Predicated region
      $region41: #{tpu_custom_call.1} parent=5 // pred_check
        %p1240 = pneg %p1239
      $region42: #{tpu_custom_call.1} parent=5 // pred_check_branch
        %1242 = sbr.rel (%p1240) target = $region44
      $region43: #{tpu_custom_call.1} parent=5 // pred_region
        %s1243 = ssub.s32 %s12, 2
        // Predicated region
        $region45: #{tpu_custom_call.1} parent=43 // pred_check
          %p1244 = pneg %p104
        $region46: #{tpu_custom_call.1} parent=43 // pred_check_branch
          %1246 = sbr.rel (%p1244) target = $region48
        $region47: #{tpu_custom_call.1} parent=43 // pred_region
          %s1247 = smul.u32 32, %s23
          %p1248 = scmp.lt.s32.totalorder %s24, 1
          %s1249 = scalar_select %p1248, %s24, 1
          %p1250 = scmp.lt.s32.totalorder %s1247, 31
          %s1251 = scalar_select %p1250, %s1247, 31
          %s1252 = smul.addr %s1249, 128
          %s1253 = sadd.s32 %s1251, %s1252
          %s1254 = smul.addr %s1253, 8
          %s1255 = scalar_lea.vmem %s2, %s1254
        $region48: #{tpu_custom_call.1} parent=43 // pred_fallthru
          _
      $region44: #{tpu_custom_call.1} parent=5 // pred_fallthru
        _
    $region6: #{tpu_custom_call.1} parent=1 // loop_footer
      %s16 = sadd.s32 1, %s12
    $region7: #{tpu_custom_call.1} parent=1 // loop_footer_branch
      %11 = sbr.rel target = $region3
    $region8: #{tpu_custom_call.1} parent=1 // loop_exit
      _
    %1256 = vsyncpa [#allocation3], 1
    %s1257 = scalar_lea.sflag [#allocation3], 1
    %1258 = vsyncpa %s1257, 1
    %1259 = vsyncpa [#allocation4], 1
    %s1260 = scalar_lea.sflag [#allocation4], 1
    %1261 = vsyncpa %s1260, 1

</llo_original>
